<compile_context>
chip_gen: v7x
topology: tpu7x:2x2x1
jax: 0.10.0
libtpu: 0.0.40
codegen_flags: <defaults>
</compile_context>

<pallas_src>
import functools
import jax
import jax.numpy as jnp
from jax import lax
from jax.experimental import pallas as pl
from jax.experimental.pallas import tpu as pltpu

NUM_IMAGE_TOKENS = 4  # global constant used by the original module's mask


def create_unified_attention_mask(seq_len: int, num_image_tokens: int) -> jax.Array:
    """Matches GPT2UnifiedAttention.create_unified_attention_mask."""
    full_mask = jnp.tril(jnp.ones((seq_len, seq_len), jnp.float32))
    combined = jnp.zeros((seq_len, seq_len), jnp.float32)
    combined = combined.at[:num_image_tokens, :num_image_tokens].set(
        full_mask[:num_image_tokens, :num_image_tokens])
    combined = combined.at[num_image_tokens:, :].set(full_mask[num_image_tokens:, :])
    return combined


def _pick_head_group(n_heads: int, head_dim: int, target_width: int = 256) -> int:
    """Largest divisor G of n_heads with G*head_dim <= target_width (MXU fill)."""
    g = max(1, min(n_heads, target_width // max(head_dim, 1)))
    while n_heads % g:
        g -= 1
    return g


def _unified_attention_kernel(x_ref, bias_ref, wqkv_ref, bqkv_ref, wproj_ref,
                              bproj_ref, out_ref, acc_ref,
                              *, n_groups, group, head_dim):
    g = pl.program_id(1)

    @pl.when(g == 0)
    def _init():
        acc_ref[...] = jnp.zeros_like(acc_ref)

    x = x_ref[0]                                 # (S, E) bf16 (pre-cast in wrapper)

    # Resident per-group weight blocks (dynamic index on leading dims only).
    wq = wqkv_ref[0, g]                          # (E, G*D) bf16, scale folded into Q
    wk = wqkv_ref[1, g]
    wv = wqkv_ref[2, g]
    bq = bqkv_ref[0, g]                          # (1, G*D) f32, scale folded into Q
    bk = bqkv_ref[1, g]
    bv = bqkv_ref[2, g]

    # Grouped QKV projection: (S,E) @ (E,G*D), bf16 operands, f32 accumulation.
    q = jnp.dot(x, wq, preferred_element_type=jnp.float32) + bq      # (S, G*D) f32
    k = jnp.dot(x, wk, preferred_element_type=jnp.float32) + bk
    v = jnp.dot(x, wv, preferred_element_type=jnp.float32) + bv

    bias = bias_ref[...]                         # (S, S) f32 additive mask (0 / -1e30)

    # Per-head scores / softmax / PV inside the group (static unroll, static slices).
    head_outs = []
    for j in range(group):
        sl = slice(j * head_dim, (j + 1) * head_dim)
        qh = q[:, sl].astype(jnp.bfloat16)
        kh = k[:, sl].astype(jnp.bfloat16)
        vh = v[:, sl].astype(jnp.bfloat16)
        # scores = qh @ kh^T without materializing kh^T (contract last dims).
        s = lax.dot_general(qh, kh, (((1,), (1,)), ((), ())),
                            preferred_element_type=jnp.float32)      # (S, S) f32
        s = s + bias
        s = s - jnp.max(s, axis=-1, keepdims=True)
        p = jnp.exp(s)
        p = p * pl.reciprocal(jnp.sum(p, axis=-1, keepdims=True), approx=True)
        head_outs.append(jnp.dot(p.astype(jnp.bfloat16), vh,
                                 preferred_element_type=jnp.float32))  # (S, D) f32

    grp_out = head_outs[0] if group == 1 else jnp.concatenate(head_outs, axis=-1)

    # Fused c_proj for this head group: (S, G*D) @ (G*D, E), accumulate in f32.
    acc_ref[...] += jnp.dot(grp_out.astype(jnp.bfloat16), wproj_ref[g],
                            preferred_element_type=jnp.float32)

    @pl.when(g == n_groups - 1)
    def _finalize():
        out_ref[0] = (acc_ref[...] + bproj_ref[...]).astype(out_ref.dtype)


def _vmem_bytes_estimate(S, E, H, D, G, out_itemsize):
    GD, ng = G * D, H // G
    bf2, f4 = 2, 4
    x_blk = S * E * bf2
    out_blk = S * E * out_itemsize
    mask = S * S * f4
    wqkv = 3 * ng * E * GD * bf2
    bqkv = 3 * ng * GD * f4
    wproj = ng * GD * E * bf2
    bproj = E * f4
    acc = S * E * f4
    # conservative: every pipelined operand double-buffered
    pipelined = 2 * (x_blk + out_blk + mask + wqkv + bqkv + wproj + bproj)
    # in-kernel temporaries: q/k/v, scores + probs, group output (all f32)
    temps = 3 * S * GD * f4 + 2 * S * S * f4 + S * GD * f4
    return pipelined + acc + temps


def gpt2_unified_attention(x, wqkv, bqkv, wproj, bproj, *, n_heads,
                           num_image_tokens=NUM_IMAGE_TOKENS):
    """x: (B,S,E). wqkv: (E,3E), bqkv: (3E,), wproj: (E,E), bproj: (E,).
    Weights are stored as (in_features, out_features) = nn.Linear.weight.T."""
    B, S, E = x.shape
    assert E % n_heads == 0
    D = E // n_heads
    scale = D ** (-0.5)
    G = _pick_head_group(n_heads, D)             # heads per grid step
    n_groups = n_heads // G
    GD = G * D
    out_dtype = x.dtype

    # ---- one-time layout plumbing + bf16 casting outside the kernel ----
    # c_attn weight: (E,3E) -> (3, H, E, D) -> (3, n_groups, E, G*D), scale folded in Q.
    w3 = wqkv.astype(jnp.float32).reshape(E, 3, n_heads, D).transpose(1, 2, 0, 3)
    w3 = w3.at[0].multiply(scale)
    wqkv_r = (w3.reshape(3, n_groups, G, E, D)
                .transpose(0, 1, 3, 2, 4)
                .reshape(3, n_groups, E, GD)
                .astype(jnp.bfloat16))
    # c_attn bias: (3E,) -> (3, n_groups, 1, G*D) f32, scale folded in Q.
    b3 = bqkv.astype(jnp.float32).reshape(3, n_heads, D)
    b3 = b3.at[0].multiply(scale)
    bqkv_r = b3.reshape(3, n_groups, 1, GD)
    # c_proj weight rows per head group: (E,E) -> (n_groups, G*D, E) bf16.
    wproj_r = wproj.reshape(n_groups, GD, E).astype(jnp.bfloat16)
    bproj_r = bproj.reshape(1, E).astype(jnp.float32)
    # Input pre-cast to bf16 (halves HBM->VMEM traffic; matmuls accumulate in f32).
    x_bf = x.astype(jnp.bfloat16)
    # Unified mask as a resident additive bias (finite negative: no NaN rows).
    mask01 = create_unified_attention_mask(S, num_image_tokens)
    bias = jnp.where(mask01 == 0.0, jnp.float32(-1e30), jnp.float32(0.0))

    vmem_est = _vmem_bytes_estimate(S, E, n_heads, D, G,
                                    jnp.dtype(out_dtype).itemsize)
    vmem_limit = int(min(40 * 1024 * 1024, max(16 * 1024 * 1024, 2 * vmem_est)))

    kernel = functools.partial(_unified_attention_kernel,
                               n_groups=n_groups, group=G, head_dim=D)

    return pl.pallas_call(
        kernel,
        out_shape=jax.ShapeDtypeStruct((B, S, E), out_dtype),
        grid_spec=pltpu.PrefetchScalarGridSpec(
            num_scalar_prefetch=0,
            grid=(B, n_groups),
            in_specs=[
                # x: re-DMA'd only when the batch index changes.
                pl.BlockSpec((1, S, E), lambda b, g: (b, 0, 0)),
                # Everything below: constant index_map -> DMA'd once, VMEM-resident.
                pl.BlockSpec((S, S), lambda b, g: (0, 0)),                       # mask bias
                pl.BlockSpec((3, n_groups, E, GD), lambda b, g: (0, 0, 0, 0)),   # c_attn W
                pl.BlockSpec((3, n_groups, 1, GD), lambda b, g: (0, 0, 0, 0)),   # c_attn b
                pl.BlockSpec((n_groups, GD, E), lambda b, g: (0, 0, 0)),         # c_proj W
                pl.BlockSpec((1, E), lambda b, g: (0, 0)),                       # c_proj b
            ],
            out_specs=pl.BlockSpec((1, S, E), lambda b, g: (b, 0, 0)),
            scratch_shapes=[pltpu.VMEM((S, E), jnp.float32)],   # fused c_proj accumulator
        ),
        compiler_params=pltpu.CompilerParams(
            dimension_semantics=("parallel", "arbitrary"),
            vmem_limit_bytes=vmem_limit,
        ),
    )(x_bf, bias, wqkv_r, bqkv_r, wproj_r, bproj_r)


def _reference(x, wqkv, bqkv, wproj, bproj, mask, n_heads):
    """Pure-JAX f32 reference mirroring the PyTorch forward (dropout = identity)."""
    B, S, E = x.shape
    D = E // n_heads
    qkv = x @ wqkv + bqkv
    q, k, v = jnp.split(qkv, 3, axis=-1)
    q = q.reshape(B, S, n_heads, D).transpose(0, 2, 1, 3)
    k = k.reshape(B, S, n_heads, D).transpose(0, 2, 1, 3)
    v = v.reshape(B, S, n_heads, D).transpose(0, 2, 1, 3)
    s = (q @ k.transpose(0, 1, 3, 2)) * (D ** -0.5)
    s = jnp.where(mask[None, None] == 0.0, -jnp.inf, s)
    p = jax.nn.softmax(s, axis=-1)
    attn = (p @ v).transpose(0, 2, 1, 3).reshape(B, S, E)
    return attn @ wproj + bproj


if __name__ == "__main__":
    # small config: batch=2, seq=8, embed=32, heads=4 (head_size=8)
    B, S, E, H = 2, 8, 32, 4

    key = jax.random.PRNGKey(0)
    kx, kw1, kb1, kw2, kb2 = jax.random.split(key, 5)

    x = jax.random.normal(kx, (B, S, E), dtype=jnp.float32)
    wqkv = jax.random.normal(kw1, (E, 3 * E), dtype=jnp.float32) * 0.02
    bqkv = jax.random.normal(kb1, (3 * E,), dtype=jnp.float32) * 0.02
    wproj = jax.random.normal(kw2, (E, E), dtype=jnp.float32) * 0.02
    bproj = jax.random.normal(kb2, (E,), dtype=jnp.float32) * 0.02

    out = gpt2_unified_attention(x, wqkv, bqkv, wproj, bproj, n_heads=H)
    out = jax.block_until_ready(out)

    mask = create_unified_attention_mask(S, NUM_IMAGE_TOKENS)
    ref = _reference(x, wqkv, bqkv, wproj, bproj, mask, H)

    assert out.shape == (B, S, E)
    # bf16 MXU operands with f32 accumulation -> loose-but-tight-enough tolerance.
    assert jnp.allclose(out, ref, atol=2e-2, rtol=2e-2), "mismatch vs reference"

    print("KERNEL_OK")
</pallas_src>

<mosaic_0001>
module attributes {stable_mosaic.version = 11 : i64} {
  func.func @_unified_attention_kernel(%arg0: i32, %arg1: i32, %arg2: memref<1x8x32xbf16, #tpu.memory_space<vmem>>, %arg3: memref<8x8xf32, #tpu.memory_space<vmem>>, %arg4: memref<3x1x32x32xbf16, #tpu.memory_space<vmem>>, %arg5: memref<3x1x1x32xf32, #tpu.memory_space<vmem>>, %arg6: memref<1x32x32xbf16, #tpu.memory_space<vmem>>, %arg7: memref<1x32xf32, #tpu.memory_space<vmem>>, %arg8: memref<1x8x32xf32, #tpu.memory_space<vmem>>, %arg9: memref<8x32xf32, #tpu.memory_space<vmem>>) attributes {dimension_semantics = [#tpu.dimension_semantics<parallel>, #tpu.dimension_semantics<arbitrary>], iteration_bounds = array<i64: 2, 1>, scalar_prefetch = 0 : i64, scratch_operands = 1 : i64, tpu.core_type = #tpu.core_type<tc>, window_params = [{transform_indices = @transform_0, window_bounds = array<i64: 1, 8, 32>}, {pipeline_mode = #tpu.pipeline_mode<synchronous>, transform_indices = @transform_1, window_bounds = array<i64: 8, 8>}, {pipeline_mode = #tpu.pipeline_mode<synchronous>, transform_indices = @transform_2, window_bounds = array<i64: 3, 1, 32, 32>}, {pipeline_mode = #tpu.pipeline_mode<synchronous>, transform_indices = @transform_3, window_bounds = array<i64: 3, 1, 1, 32>}, {pipeline_mode = #tpu.pipeline_mode<synchronous>, transform_indices = @transform_4, window_bounds = array<i64: 1, 32, 32>}, {pipeline_mode = #tpu.pipeline_mode<synchronous>, transform_indices = @transform_5, window_bounds = array<i64: 1, 32>}, {transform_indices = @transform_6, window_bounds = array<i64: 1, 8, 32>}]} {
    %c0_i32 = arith.constant 0 : i32
    %0 = arith.cmpi eq, %arg1, %c0_i32 : i32
    %1 = arith.extui %0 : i1 to i32
    %c0_i32_0 = arith.constant 0 : i32
    %2 = arith.cmpi ne, %1, %c0_i32_0 : i32
    scf.if %2 {
      %cst_48 = arith.constant 0.000000e+00 : f32
      %125 = vector.broadcast %cst_48 : f32 to vector<8x32xf32>
      %c0_49 = arith.constant 0 : index
      %c0_50 = arith.constant 0 : index
      %126 = vector.load %arg9[%c0_49, %c0_50] : memref<8x32xf32, #tpu.memory_space<vmem>>, vector<8x32xf32>
      tpu.vector_store %arg9[%c0_49, %c0_50], %125 {strides = array<i32>} : memref<8x32xf32, #tpu.memory_space<vmem>>, vector<8x32xf32>,
    } else {
    }
    %c0 = arith.constant 0 : index
    %c0_1 = arith.constant 0 : index
    %c0_2 = arith.constant 0 : index
    %3 = vector.load %arg2[%c0, %c0_1, %c0_2] : memref<1x8x32xbf16, #tpu.memory_space<vmem>>, vector<1x8x32xbf16>
    %4 = vector.shape_cast %3 : vector<1x8x32xbf16> to vector<8x32xbf16>
    %c0_3 = arith.constant 0 : index
    %5 = arith.index_cast %arg1 : i32 to index
    %c0_4 = arith.constant 0 : index
    %c0_5 = arith.constant 0 : index
    %6 = vector.load %arg4[%c0_3, %5, %c0_4, %c0_5] : memref<3x1x32x32xbf16, #tpu.memory_space<vmem>>, vector<1x1x32x32xbf16>
    %7 = vector.shape_cast %6 : vector<1x1x32x32xbf16> to vector<32x32xbf16>
    %c1 = arith.constant 1 : index
    %8 = arith.index_cast %arg1 : i32 to index
    %c0_6 = arith.constant 0 : index
    %c0_7 = arith.constant 0 : index
    %9 = vector.load %arg4[%c1, %8, %c0_6, %c0_7] : memref<3x1x32x32xbf16, #tpu.memory_space<vmem>>, vector<1x1x32x32xbf16>
    %10 = vector.shape_cast %9 : vector<1x1x32x32xbf16> to vector<32x32xbf16>
    %c2 = arith.constant 2 : index
    %11 = arith.index_cast %arg1 : i32 to index
    %c0_8 = arith.constant 0 : index
    %c0_9 = arith.constant 0 : index
    %12 = vector.load %arg4[%c2, %11, %c0_8, %c0_9] : memref<3x1x32x32xbf16, #tpu.memory_space<vmem>>, vector<1x1x32x32xbf16>
    %13 = vector.shape_cast %12 : vector<1x1x32x32xbf16> to vector<32x32xbf16>
    %c0_10 = arith.constant 0 : index
    %14 = arith.index_cast %arg1 : i32 to index
    %c0_11 = arith.constant 0 : index
    %c0_12 = arith.constant 0 : index
    %15 = vector.load %arg5[%c0_10, %14, %c0_11, %c0_12] : memref<3x1x1x32xf32, #tpu.memory_space<vmem>>, vector<1x1x1x32xf32>
    %16 = vector.shape_cast %15 : vector<1x1x1x32xf32> to vector<1x32xf32>
    %c1_13 = arith.constant 1 : index
    %17 = arith.index_cast %arg1 : i32 to index
    %c0_14 = arith.constant 0 : index
    %c0_15 = arith.constant 0 : index
    %18 = vector.load %arg5[%c1_13, %17, %c0_14, %c0_15] : memref<3x1x1x32xf32, #tpu.memory_space<vmem>>, vector<1x1x1x32xf32>
    %19 = vector.shape_cast %18 : vector<1x1x1x32xf32> to vector<1x32xf32>
    %c2_16 = arith.constant 2 : index
    %20 = arith.index_cast %arg1 : i32 to index
    %c0_17 = arith.constant 0 : index
    %c0_18 = arith.constant 0 : index
    %21 = vector.load %arg5[%c2_16, %20, %c0_17, %c0_18] : memref<3x1x1x32xf32, #tpu.memory_space<vmem>>, vector<1x1x1x32xf32>
    %22 = vector.shape_cast %21 : vector<1x1x1x32xf32> to vector<1x32xf32>
    %cst = arith.constant dense<0.000000e+00> : vector<8x32xf32>
    %23 = tpu.matmul %4, %7, %cst {dimension_numbers = #tpu.dot_dimension_numbers<[1], [0], [0], [1], [0, 0, 1, 1], [], []>} : vector<8x32xbf16>, vector<32x32xbf16>, vector<8x32xf32> -> vector<8x32xf32>
    %24 = vector.broadcast %16 : vector<1x32xf32> to vector<8x32xf32>
    %25 = arith.addf %23, %24 : vector<8x32xf32>
    %cst_19 = arith.constant dense<0.000000e+00> : vector<8x32xf32>
    %26 = tpu.matmul %4, %10, %cst_19 {dimension_numbers = #tpu.dot_dimension_numbers<[1], [0], [0], [1], [0, 0, 1, 1], [], []>} : vector<8x32xbf16>, vector<32x32xbf16>, vector<8x32xf32> -> vector<8x32xf32>
    %27 = vector.broadcast %19 : vector<1x32xf32> to vector<8x32xf32>
    %28 = arith.addf %26, %27 : vector<8x32xf32>
    %cst_20 = arith.constant dense<0.000000e+00> : vector<8x32xf32>
    %29 = tpu.matmul %4, %13, %cst_20 {dimension_numbers = #tpu.dot_dimension_numbers<[1], [0], [0], [1], [0, 0, 1, 1], [], []>} : vector<8x32xbf16>, vector<32x32xbf16>, vector<8x32xf32> -> vector<8x32xf32>
    %30 = vector.broadcast %22 : vector<1x32xf32> to vector<8x32xf32>
    %31 = arith.addf %29, %30 : vector<8x32xf32>
    %c0_21 = arith.constant 0 : index
    %c0_22 = arith.constant 0 : index
    %32 = vector.load %arg3[%c0_21, %c0_22] : memref<8x8xf32, #tpu.memory_space<vmem>>, vector<8x8xf32>
    %33 = vector.extract_strided_slice %25 {offsets = [0, 0], sizes = [8, 8], strides = [1, 1]} : vector<8x32xf32> to vector<8x8xf32>
    %34 = arith.truncf %33 : vector<8x8xf32> to vector<8x8xbf16>
    %35 = vector.extract_strided_slice %28 {offsets = [0, 0], sizes = [8, 8], strides = [1, 1]} : vector<8x32xf32> to vector<8x8xf32>
    %36 = arith.truncf %35 : vector<8x8xf32> to vector<8x8xbf16>
    %37 = vector.extract_strided_slice %31 {offsets = [0, 0], sizes = [8, 8], strides = [1, 1]} : vector<8x32xf32> to vector<8x8xf32>
    %38 = arith.truncf %37 : vector<8x8xf32> to vector<8x8xbf16>
    %cst_23 = arith.constant dense<0.000000e+00> : vector<8x8xf32>
    %39 = tpu.matmul %34, %36, %cst_23 {dimension_numbers = #tpu.dot_dimension_numbers<[1], [1], [0], [0], [0, 0, 1, 0], [], []>} : vector<8x8xbf16>, vector<8x8xbf16>, vector<8x8xf32> -> vector<8x8xf32>
    %40 = arith.addf %39, %32 : vector<8x8xf32>
    %cst_24 = arith.constant dense<0xFF800000> : vector<8xf32>
    %41 = vector.multi_reduction <maximumf>, %40, %cst_24 [1] : vector<8x8xf32> to vector<8xf32>
    %42 = vector.shape_cast %41 : vector<8xf32> to vector<8x1xf32>
    %43 = vector.broadcast %42 : vector<8x1xf32> to vector<8x8xf32>
    %44 = arith.subf %40, %43 : vector<8x8xf32>
    %45 = math.exp %44 : vector<8x8xf32>
    %cst_25 = arith.constant dense<0.000000e+00> : vector<8xf32>
    %46 = vector.multi_reduction <add>, %45, %cst_25 [1] : vector<8x8xf32> to vector<8xf32>
    %47 = vector.shape_cast %46 : vector<8xf32> to vector<8x1xf32>
    %48 = tpu.reciprocal %47 {approx = true} : vector<8x1xf32> -> vector<8x1xf32>
    %49 = vector.broadcast %48 : vector<8x1xf32> to vector<8x8xf32>
    %50 = arith.mulf %45, %49 : vector<8x8xf32>
    %51 = arith.truncf %50 : vector<8x8xf32> to vector<8x8xbf16>
    %cst_26 = arith.constant dense<0.000000e+00> : vector<8x8xf32>
    %52 = tpu.matmul %51, %38, %cst_26 {dimension_numbers = #tpu.dot_dimension_numbers<[1], [0], [0], [1], [0, 0, 1, 1], [], []>} : vector<8x8xbf16>, vector<8x8xbf16>, vector<8x8xf32> -> vector<8x8xf32>
    %53 = vector.extract_strided_slice %25 {offsets = [0, 8], sizes = [8, 8], strides = [1, 1]} : vector<8x32xf32> to vector<8x8xf32>
    %54 = arith.truncf %53 : vector<8x8xf32> to vector<8x8xbf16>
    %55 = vector.extract_strided_slice %28 {offsets = [0, 8], sizes = [8, 8], strides = [1, 1]} : vector<8x32xf32> to vector<8x8xf32>
    %56 = arith.truncf %55 : vector<8x8xf32> to vector<8x8xbf16>
    %57 = vector.extract_strided_slice %31 {offsets = [0, 8], sizes = [8, 8], strides = [1, 1]} : vector<8x32xf32> to vector<8x8xf32>
    %58 = arith.truncf %57 : vector<8x8xf32> to vector<8x8xbf16>
    %cst_27 = arith.constant dense<0.000000e+00> : vector<8x8xf32>
    %59 = tpu.matmul %54, %56, %cst_27 {dimension_numbers = #tpu.dot_dimension_numbers<[1], [1], [0], [0], [0, 0, 1, 0], [], []>} : vector<8x8xbf16>, vector<8x8xbf16>, vector<8x8xf32> -> vector<8x8xf32>
    %60 = arith.addf %59, %32 : vector<8x8xf32>
    %cst_28 = arith.constant dense<0xFF800000> : vector<8xf32>
    %61 = vector.multi_reduction <maximumf>, %60, %cst_28 [1] : vector<8x8xf32> to vector<8xf32>
    %62 = vector.shape_cast %61 : vector<8xf32> to vector<8x1xf32>
    %63 = vector.broadcast %62 : vector<8x1xf32> to vector<8x8xf32>
    %64 = arith.subf %60, %63 : vector<8x8xf32>
    %65 = math.exp %64 : vector<8x8xf32>
    %cst_29 = arith.constant dense<0.000000e+00> : vector<8xf32>
    %66 = vector.multi_reduction <add>, %65, %cst_29 [1] : vector<8x8xf32> to vector<8xf32>
    %67 = vector.shape_cast %66 : vector<8xf32> to vector<8x1xf32>
    %68 = tpu.reciprocal %67 {approx = true} : vector<8x1xf32> -> vector<8x1xf32>
    %69 = vector.broadcast %68 : vector<8x1xf32> to vector<8x8xf32>
    %70 = arith.mulf %65, %69 : vector<8x8xf32>
    %71 = arith.truncf %70 : vector<8x8xf32> to vector<8x8xbf16>
    %cst_30 = arith.constant dense<0.000000e+00> : vector<8x8xf32>
    %72 = tpu.matmul %71, %58, %cst_30 {dimension_numbers = #tpu.dot_dimension_numbers<[1], [0], [0], [1], [0, 0, 1, 1], [], []>} : vector<8x8xbf16>, vector<8x8xbf16>, vector<8x8xf32> -> vector<8x8xf32>
    %73 = vector.extract_strided_slice %25 {offsets = [0, 16], sizes = [8, 8], strides = [1, 1]} : vector<8x32xf32> to vector<8x8xf32>
    %74 = arith.truncf %73 : vector<8x8xf32> to vector<8x8xbf16>
    %75 = vector.extract_strided_slice %28 {offsets = [0, 16], sizes = [8, 8], strides = [1, 1]} : vector<8x32xf32> to vector<8x8xf32>
    %76 = arith.truncf %75 : vector<8x8xf32> to vector<8x8xbf16>
    %77 = vector.extract_strided_slice %31 {offsets = [0, 16], sizes = [8, 8], strides = [1, 1]} : vector<8x32xf32> to vector<8x8xf32>
    %78 = arith.truncf %77 : vector<8x8xf32> to vector<8x8xbf16>
    %cst_31 = arith.constant dense<0.000000e+00> : vector<8x8xf32>
    %79 = tpu.matmul %74, %76, %cst_31 {dimension_numbers = #tpu.dot_dimension_numbers<[1], [1], [0], [0], [0, 0, 1, 0], [], []>} : vector<8x8xbf16>, vector<8x8xbf16>, vector<8x8xf32> -> vector<8x8xf32>
    %80 = arith.addf %79, %32 : vector<8x8xf32>
    %cst_32 = arith.constant dense<0xFF800000> : vector<8xf32>
    %81 = vector.multi_reduction <maximumf>, %80, %cst_32 [1] : vector<8x8xf32> to vector<8xf32>
    %82 = vector.shape_cast %81 : vector<8xf32> to vector<8x1xf32>
    %83 = vector.broadcast %82 : vector<8x1xf32> to vector<8x8xf32>
    %84 = arith.subf %80, %83 : vector<8x8xf32>
    %85 = math.exp %84 : vector<8x8xf32>
    %cst_33 = arith.constant dense<0.000000e+00> : vector<8xf32>
    %86 = vector.multi_reduction <add>, %85, %cst_33 [1] : vector<8x8xf32> to vector<8xf32>
    %87 = vector.shape_cast %86 : vector<8xf32> to vector<8x1xf32>
    %88 = tpu.reciprocal %87 {approx = true} : vector<8x1xf32> -> vector<8x1xf32>
    %89 = vector.broadcast %88 : vector<8x1xf32> to vector<8x8xf32>
    %90 = arith.mulf %85, %89 : vector<8x8xf32>
    %91 = arith.truncf %90 : vector<8x8xf32> to vector<8x8xbf16>
    %cst_34 = arith.constant dense<0.000000e+00> : vector<8x8xf32>
    %92 = tpu.matmul %91, %78, %cst_34 {dimension_numbers = #tpu.dot_dimension_numbers<[1], [0], [0], [1], [0, 0, 1, 1], [], []>} : vector<8x8xbf16>, vector<8x8xbf16>, vector<8x8xf32> -> vector<8x8xf32>
    %93 = vector.extract_strided_slice %25 {offsets = [0, 24], sizes = [8, 8], strides = [1, 1]} : vector<8x32xf32> to vector<8x8xf32>
    %94 = arith.truncf %93 : vector<8x8xf32> to vector<8x8xbf16>
    %95 = vector.extract_strided_slice %28 {offsets = [0, 24], sizes = [8, 8], strides = [1, 1]} : vector<8x32xf32> to vector<8x8xf32>
    %96 = arith.truncf %95 : vector<8x8xf32> to vector<8x8xbf16>
    %97 = vector.extract_strided_slice %31 {offsets = [0, 24], sizes = [8, 8], strides = [1, 1]} : vector<8x32xf32> to vector<8x8xf32>
    %98 = arith.truncf %97 : vector<8x8xf32> to vector<8x8xbf16>
    %cst_35 = arith.constant dense<0.000000e+00> : vector<8x8xf32>
    %99 = tpu.matmul %94, %96, %cst_35 {dimension_numbers = #tpu.dot_dimension_numbers<[1], [1], [0], [0], [0, 0, 1, 0], [], []>} : vector<8x8xbf16>, vector<8x8xbf16>, vector<8x8xf32> -> vector<8x8xf32>
    %100 = arith.addf %99, %32 : vector<8x8xf32>
    %cst_36 = arith.constant dense<0xFF800000> : vector<8xf32>
    %101 = vector.multi_reduction <maximumf>, %100, %cst_36 [1] : vector<8x8xf32> to vector<8xf32>
    %102 = vector.shape_cast %101 : vector<8xf32> to vector<8x1xf32>
    %103 = vector.broadcast %102 : vector<8x1xf32> to vector<8x8xf32>
    %104 = arith.subf %100, %103 : vector<8x8xf32>
    %105 = math.exp %104 : vector<8x8xf32>
    %cst_37 = arith.constant dense<0.000000e+00> : vector<8xf32>
    %106 = vector.multi_reduction <add>, %105, %cst_37 [1] : vector<8x8xf32> to vector<8xf32>
    %107 = vector.shape_cast %106 : vector<8xf32> to vector<8x1xf32>
    %108 = tpu.reciprocal %107 {approx = true} : vector<8x1xf32> -> vector<8x1xf32>
    %109 = vector.broadcast %108 : vector<8x1xf32> to vector<8x8xf32>
    %110 = arith.mulf %105, %109 : vector<8x8xf32>
    %111 = arith.truncf %110 : vector<8x8xf32> to vector<8x8xbf16>
    %cst_38 = arith.constant dense<0.000000e+00> : vector<8x8xf32>
    %112 = tpu.matmul %111, %98, %cst_38 {dimension_numbers = #tpu.dot_dimension_numbers<[1], [0], [0], [1], [0, 0, 1, 1], [], []>} : vector<8x8xbf16>, vector<8x8xbf16>, vector<8x8xf32> -> vector<8x8xf32>
    %113 = tpu.concatenate %52, %72, %92, %112 in 1 : vector<8x8xf32>, vector<8x8xf32>, vector<8x8xf32>, vector<8x8xf32> -> vector<8x32xf32>
    %c0_39 = arith.constant 0 : index
    %c0_40 = arith.constant 0 : index
    %114 = vector.load %arg9[%c0_39, %c0_40] : memref<8x32xf32, #tpu.memory_space<vmem>>, vector<8x32xf32>
    %115 = arith.truncf %113 : vector<8x32xf32> to vector<8x32xbf16>
    %116 = arith.index_cast %arg1 : i32 to index
    %c0_41 = arith.constant 0 : index
    %c0_42 = arith.constant 0 : index
    %117 = vector.load %arg6[%116, %c0_41, %c0_42] : memref<1x32x32xbf16, #tpu.memory_space<vmem>>, vector<1x32x32xbf16>
    %118 = vector.shape_cast %117 : vector<1x32x32xbf16> to vector<32x32xbf16>
    %cst_43 = arith.constant dense<0.000000e+00> : vector<8x32xf32>
    %119 = tpu.matmul %115, %118, %cst_43 {dimension_numbers = #tpu.dot_dimension_numbers<[1], [0], [0], [1], [0, 0, 1, 1], [], []>} : vector<8x32xbf16>, vector<32x32xbf16>, vector<8x32xf32> -> vector<8x32xf32>
    %120 = arith.addf %114, %119 : vector<8x32xf32>
    %c0_44 = arith.constant 0 : index
    %c0_45 = arith.constant 0 : index
    %121 = vector.load %arg9[%c0_44, %c0_45] : memref<8x32xf32, #tpu.memory_space<vmem>>, vector<8x32xf32>
    tpu.vector_store %arg9[%c0_44, %c0_45], %120 {strides = array<i32>} : memref<8x32xf32, #tpu.memory_space<vmem>>, vector<8x32xf32>,
    %c0_i32_46 = arith.constant 0 : i32
    %122 = arith.cmpi eq, %arg1, %c0_i32_46 : i32
    %123 = arith.extui %122 : i1 to i32
    %c0_i32_47 = arith.constant 0 : i32
    %124 = arith.cmpi ne, %123, %c0_i32_47 : i32
    scf.if %124 {
      %c0_48 = arith.constant 0 : index
      %c0_49 = arith.constant 0 : index
      %125 = vector.load %arg9[%c0_48, %c0_49] : memref<8x32xf32, #tpu.memory_space<vmem>>, vector<8x32xf32>
      %c0_50 = arith.constant 0 : index
      %c0_51 = arith.constant 0 : index
      %126 = vector.load %arg7[%c0_50, %c0_51] : memref<1x32xf32, #tpu.memory_space<vmem>>, vector<1x32xf32>
      %127 = vector.broadcast %126 : vector<1x32xf32> to vector<8x32xf32>
      %128 = arith.addf %125, %127 : vector<8x32xf32>
      %c0_52 = arith.constant 0 : index
      %c0_53 = arith.constant 0 : index
      %c0_54 = arith.constant 0 : index
      %129 = vector.load %arg8[%c0_52, %c0_53, %c0_54] : memref<1x8x32xf32, #tpu.memory_space<vmem>>, vector<1x8x32xf32>
      %130 = vector.shape_cast %129 : vector<1x8x32xf32> to vector<8x32xf32>
      %131 = vector.shape_cast %128 : vector<8x32xf32> to vector<1x8x32xf32>
      tpu.vector_store %arg8[%c0_52, %c0_53, %c0_54], %131 {strides = array<i32>} : memref<1x8x32xf32, #tpu.memory_space<vmem>>, vector<1x8x32xf32>,
    } else {
    }
    return
  }
  func.func @transform_0(%arg0: i32, %arg1: i32) -> (i32, i32, i32) {
    %c0_i32 = arith.constant 0 : i32
    %c0_i32_0 = arith.constant 0 : i32
    %c0_i32_1 = arith.constant 0 : i32
    return %arg0, %c0_i32, %c0_i32_0 : i32, i32, i32
  }
  func.func @transform_1(%arg0: i32, %arg1: i32) -> (i32, i32) {
    %c0_i32 = arith.constant 0 : i32
    %c0_i32_0 = arith.constant 0 : i32
    %c0_i32_1 = arith.constant 0 : i32
    return %c0_i32, %c0_i32_0 : i32, i32
  }
  func.func @transform_2(%arg0: i32, %arg1: i32) -> (i32, i32, i32, i32) {
    %c0_i32 = arith.constant 0 : i32
    %c0_i32_0 = arith.constant 0 : i32
    %c0_i32_1 = arith.constant 0 : i32
    %c0_i32_2 = arith.constant 0 : i32
    %c0_i32_3 = arith.constant 0 : i32
    return %c0_i32, %c0_i32_0, %c0_i32_1, %c0_i32_2 : i32, i32, i32, i32
  }
  func.func @transform_3(%arg0: i32, %arg1: i32) -> (i32, i32, i32, i32) {
    %c0_i32 = arith.constant 0 : i32
    %c0_i32_0 = arith.constant 0 : i32
    %c0_i32_1 = arith.constant 0 : i32
    %c0_i32_2 = arith.constant 0 : i32
    %c0_i32_3 = arith.constant 0 : i32
    return %c0_i32, %c0_i32_0, %c0_i32_1, %c0_i32_2 : i32, i32, i32, i32
  }
  func.func @transform_4(%arg0: i32, %arg1: i32) -> (i32, i32, i32) {
    %c0_i32 = arith.constant 0 : i32
    %c0_i32_0 = arith.constant 0 : i32
    %c0_i32_1 = arith.constant 0 : i32
    %c0_i32_2 = arith.constant 0 : i32
    return %c0_i32, %c0_i32_0, %c0_i32_1 : i32, i32, i32
  }
  func.func @transform_5(%arg0: i32, %arg1: i32) -> (i32, i32) {
    %c0_i32 = arith.constant 0 : i32
    %c0_i32_0 = arith.constant 0 : i32
    %c0_i32_1 = arith.constant 0 : i32
    return %c0_i32, %c0_i32_0 : i32, i32
  }
  func.func @transform_6(%arg0: i32, %arg1: i32) -> (i32, i32, i32) {
    %c0_i32 = arith.constant 0 : i32
    %c0_i32_0 = arith.constant 0 : i32
    %c0_i32_1 = arith.constant 0 : i32
    return %arg0, %c0_i32, %c0_i32_0 : i32, i32, i32
  }
}

</mosaic_0001>

<llo_original>
// kernel: tpu_custom_call.1
$region0: #{tpu_custom_call.1}
  #allocation0 [shape = 'u32[]', space=smem, size = 0x4, offset = 0x4, fixed_abs, tag = 'smem constant byte address 0x4 - core index']
  #allocation1 [shape = 'u32[144,128]{1,0:T(1,128)}', space=vmem, size = 0x12000, scoped, tag = 'internal scratch']
  #allocation2 [shape = 'f32[8,32]{1,0:T(8,128)}', space=vmem, size = 0x1000, scoped, tag = 'scratch operand']
  %s0 = inlined_call_operand.hbm [shape: bf16[2,8,32], index: 0, kind: input, shape index: {}]
  %s1 = inlined_call_operand.hbm [shape: f32[8,8], index: 1, kind: input, shape index: {}]
  %s2 = inlined_call_operand.hbm [shape: bf16[3,1,32,32], index: 2, kind: input, shape index: {}]
  %s3 = inlined_call_operand.vmem [shape: f32[3,1,1,32], index: 3, kind: input, shape index: {}]
  %s4 = inlined_call_operand.hbm [shape: bf16[1,32,32], index: 4, kind: input, shape index: {}]
  %s5 = inlined_call_operand.vmem [shape: f32[1,32], index: 5, kind: input, shape index: {}]
  %s6 = inlined_call_operand.hbm [shape: f32[2,8,32], index: 6, kind: output, shape index: {}]
  %s7 = sld [smem:[#allocation0]]
  $region81: #{tpu_custom_call.1} parent=0
    _
  %s9 = ssub.s32 1, %s7
  %s10 = scalar_select 0, %s9, %s7
  $region1: #{tpu_custom_call.1} parent=0
    #allocation3 [shape = 'u8[4096]{0}', space=vmem, size = 0x1000, scoped, tag = 'input window, operand 0']
    #allocation4 [shape = 's32[2]{0}', space=sflag, size = 0x8, scoped, tag = 'scoped memory for tpu_custom_call.1']
    #allocation5 [shape = 's32[2]{0}', space=sflag, size = 0x8, scoped, tag = 'scoped memory for tpu_custom_call.1']
    #allocation6 [shape = 'u8[4096]{0}', space=vmem, size = 0x1000, scoped, tag = 'input window, operand 1, single buffered']
    #allocation7 [shape = 's32[1]{0}', space=sflag, size = 0x4, scoped, tag = 'scoped memory for tpu_custom_call.1']
    #allocation8 [shape = 'u8[24576]{0}', space=vmem, size = 0x6000, scoped, tag = 'input window, operand 2, single buffered']
    #allocation9 [shape = 'u8[8192]{0}', space=vmem, size = 0x2000, scoped, tag = 'input window, operand 4, single buffered']
    #allocation10 [shape = 's32[1]{0}', space=sflag, size = 0x4, scoped, tag = 'scoped memory for tpu_custom_call.1']
    #allocation11 [shape = 'u8[8192]{0}', space=vmem, size = 0x2000, scoped, tag = 'output window, operand 0']
    %11 = vsyncpa [#allocation4], 0
    %s12 = scalar_lea.sflag [#allocation4], 1
    %13 = vsyncpa %s12, 0
    %14 = vsyncpa [#allocation7], 0
    %15 = vsyncpa [#allocation10], 0
    %16 = vsyncpa [#allocation5], 0
    %s17 = scalar_lea.sflag [#allocation5], 1
    %18 = vsyncpa %s17, 0
    loop: start=0, step=1, limit=4
    $region2: #{tpu_custom_call.1} parent=1 // loop_pre_header
      _
    $region3: #{tpu_custom_call.1} parent=1 // loop_header
      %s20 = sphi 0, %s24
      %p21 = scmp.ge.s32.totalorder %s20, 4
      %s27 = sphi 0, %s39
      %s28 = sphi 0, %s35
      %s29 = sphi 0, %s27
      %s30 = sphi 0, %s28
      %s31 = sphi 0, %s29
      %s32 = sphi 0, %s30
      %s42 = sphi 0, %s44
      %s45 = sphi 0, %s42
      %s46 = sphi 0, %s45
      %s62 = sphi 0, %s46
      %s66 = sphi 0, %s66
      %s68 = sphi 0, %s66
      %s69 = sphi 0, %s68
      %s83 = sphi 0, %s69
      %s87 = sphi 0, %s87
      %s89 = sphi 0, %s87
      %s90 = sphi 0, %s89
      %s104 = sphi 0, %s90
      %s108 = sphi 0, %s108
      %s110 = sphi 0, %s108
      %s111 = sphi 0, %s110
      %s125 = sphi 0, %s111
      %s129 = sphi 0, %s129
      %s131 = sphi 0, %s129
      %s132 = sphi 0, %s131
      %s146 = sphi 0, %s132
      %s150 = sphi 0, %s150
      %s152 = sphi 0, %s150
      %s153 = sphi 0, %s152
      %s167 = sphi 0, %s153
      %s173 = sphi 0, %s175
      %s176 = sphi 0, %s173
      %s177 = sphi 0, %s176
      %s193 = sphi 0, %s177
    $region4: #{tpu_custom_call.1} parent=1 // loop_header_branch
      %23 = sbr.rel (%p21) target = $region8
    $region5: #{tpu_custom_call.1} parent=1 // loop_body
      %s25 = ssub.s32 %s20, 1
      %s26 = ssub.s32 %s20, 2
      %s33 = sadd.s32 1, %s28
      %p34 = scmp.ge.s32.totalorder %s33, 1
      %s35 = scalar_select %p34, 0, %s33
      %s36 = sadd.s32 1, %s27
      %s37 = scalar_select %p34, %s36, %s27
      %p38 = scmp.ge.s32.totalorder %s37, 2
      %s39 = scalar_select %p38, 0, %s37
      %s40 = ssub.s32 %s27, %s39
      %p41 = scmp.eq.s32.totalorder %s40, 0
      %s43 = sadd.s32 %s42, 1
      %s44 = scalar_select %p41, %s42, %s43
      %p47 = pneg %p41
      %p48 = scmp.eq.s32.totalorder %s20, 1
      %p49 = por %p47, %p48
      %p50 = scmp.ne.s32.totalorder %s42, %s45
      %p51 = scmp.eq.s32.totalorder %s20, 0
      %p52 = por %p50, %p51
      %p53 = scmp.ne.s32.totalorder %s42, %s45
      %p54 = scmp.eq.s32.totalorder %s25, 1
      %p55 = por %p53, %p54
      %p56 = scmp.ne.s32.totalorder %s45, %s46
      %p57 = scmp.eq.s32.totalorder %s25, 0
      %p58 = por %p56, %p57
      %p59 = scmp.ne.s32.totalorder %s45, %s46
      %p60 = scmp.eq.s32.totalorder %s26, 1
      %p61 = por %p59, %p60
      %p63 = scmp.ne.s32.totalorder %s46, %s62
      %p64 = scmp.eq.s32.totalorder %s26, 0
      %p65 = por %p63, %p64
      %s67 = sadd.s32 %s66, 1
      %p70 = scmp.eq.s32.totalorder %s20, 1
      %p71 = scmp.ne.s32.totalorder %s66, %s68
      %p72 = scmp.eq.s32.totalorder %s20, 0
      %p73 = por %p71, %p72
      %p74 = scmp.ne.s32.totalorder %s66, %s68
      %p75 = scmp.eq.s32.totalorder %s25, 1
      %p76 = por %p74, %p75
      %p77 = scmp.ne.s32.totalorder %s68, %s69
      %p78 = scmp.eq.s32.totalorder %s25, 0
      %p79 = por %p77, %p78
      %p80 = scmp.ne.s32.totalorder %s68, %s69
      %p81 = scmp.eq.s32.totalorder %s26, 1
      %p82 = por %p80, %p81
      %p84 = scmp.ne.s32.totalorder %s69, %s83
      %p85 = scmp.eq.s32.totalorder %s26, 0
      %p86 = por %p84, %p85
      %s88 = sadd.s32 %s87, 1
      %p91 = scmp.eq.s32.totalorder %s20, 1
      %p92 = scmp.ne.s32.totalorder %s87, %s89
      %p93 = scmp.eq.s32.totalorder %s20, 0
      %p94 = por %p92, %p93
      %p95 = scmp.ne.s32.totalorder %s87, %s89
      %p96 = scmp.eq.s32.totalorder %s25, 1
      %p97 = por %p95, %p96
      %p98 = scmp.ne.s32.totalorder %s89, %s90
      %p99 = scmp.eq.s32.totalorder %s25, 0
      %p100 = por %p98, %p99
      %p101 = scmp.ne.s32.totalorder %s89, %s90
      %p102 = scmp.eq.s32.totalorder %s26, 1
      %p103 = por %p101, %p102
      %p105 = scmp.ne.s32.totalorder %s90, %s104
      %p106 = scmp.eq.s32.totalorder %s26, 0
      %p107 = por %p105, %p106
      %s109 = sadd.s32 %s108, 1
      %p112 = scmp.eq.s32.totalorder %s20, 1
      %p113 = scmp.ne.s32.totalorder %s108, %s110
      %p114 = scmp.eq.s32.totalorder %s20, 0
      %p115 = por %p113, %p114
      %p116 = scmp.ne.s32.totalorder %s108, %s110
      %p117 = scmp.eq.s32.totalorder %s25, 1
      %p118 = por %p116, %p117
      %p119 = scmp.ne.s32.totalorder %s110, %s111
      %p120 = scmp.eq.s32.totalorder %s25, 0
      %p121 = por %p119, %p120
      %p122 = scmp.ne.s32.totalorder %s110, %s111
      %p123 = scmp.eq.s32.totalorder %s26, 1
      %p124 = por %p122, %p123
      %p126 = scmp.ne.s32.totalorder %s111, %s125
      %p127 = scmp.eq.s32.totalorder %s26, 0
      %p128 = por %p126, %p127
      %s130 = sadd.s32 %s129, 1
      %p133 = scmp.eq.s32.totalorder %s20, 1
      %p134 = scmp.ne.s32.totalorder %s129, %s131
      %p135 = scmp.eq.s32.totalorder %s20, 0
      %p136 = por %p134, %p135
      %p137 = scmp.ne.s32.totalorder %s129, %s131
      %p138 = scmp.eq.s32.totalorder %s25, 1
      %p139 = por %p137, %p138
      %p140 = scmp.ne.s32.totalorder %s131, %s132
      %p141 = scmp.eq.s32.totalorder %s25, 0
      %p142 = por %p140, %p141
      %p143 = scmp.ne.s32.totalorder %s131, %s132
      %p144 = scmp.eq.s32.totalorder %s26, 1
      %p145 = por %p143, %p144
      %p147 = scmp.ne.s32.totalorder %s132, %s146
      %p148 = scmp.eq.s32.totalorder %s26, 0
      %p149 = por %p147, %p148
      %s151 = sadd.s32 %s150, 1
      %p154 = scmp.eq.s32.totalorder %s20, 1
      %p155 = scmp.ne.s32.totalorder %s150, %s152
      %p156 = scmp.eq.s32.totalorder %s20, 0
      %p157 = por %p155, %p156
      %p158 = scmp.ne.s32.totalorder %s150, %s152
      %p159 = scmp.eq.s32.totalorder %s25, 1
      %p160 = por %p158, %p159
      %p161 = scmp.ne.s32.totalorder %s152, %s153
      %p162 = scmp.eq.s32.totalorder %s25, 0
      %p163 = por %p161, %p162
      %p164 = scmp.ne.s32.totalorder %s152, %s153
      %p165 = scmp.eq.s32.totalorder %s26, 1
      %p166 = por %p164, %p165
      %p168 = scmp.ne.s32.totalorder %s153, %s167
      %p169 = scmp.eq.s32.totalorder %s26, 0
      %p170 = por %p168, %p169
      %s171 = ssub.s32 %s27, %s39
      %p172 = scmp.eq.s32.totalorder %s171, 0
      %s174 = sadd.s32 %s173, 1
      %s175 = scalar_select %p172, %s173, %s174
      %p178 = pneg %p172
      %p179 = scmp.eq.s32.totalorder %s20, 1
      %p180 = por %p178, %p179
      %p181 = scmp.ne.s32.totalorder %s173, %s176
      %p182 = scmp.eq.s32.totalorder %s20, 0
      %p183 = por %p181, %p182
      %p184 = scmp.ne.s32.totalorder %s173, %s176
      %p185 = scmp.eq.s32.totalorder %s25, 1
      %p186 = por %p184, %p185
      %p187 = scmp.ne.s32.totalorder %s176, %s177
      %p188 = scmp.eq.s32.totalorder %s25, 0
      %p189 = por %p187, %p188
      %p190 = scmp.ne.s32.totalorder %s176, %s177
      %p191 = scmp.eq.s32.totalorder %s26, 1
      %p192 = por %p190, %p191
      %p194 = scmp.ne.s32.totalorder %s177, %s193
      %p195 = scmp.eq.s32.totalorder %s26, 0
      %p196 = por %p194, %p195
      %p197 = scmp.le.s32.totalorder 1, %s20
      %p198 = scmp.lt.s32.totalorder %s20, 3
      %p199 = pnand %p197, %p198
      %p200 = pneg %p199
      // Predicated region
      $region9: #{tpu_custom_call.1} parent=5 // pred_check
        _
      $region10: #{tpu_custom_call.1} parent=5 // pred_check_branch
        %202 = sbr.rel (%p199) target = $region12
      $region11: #{tpu_custom_call.1} parent=5 // pred_region
        %s203 = ssub.s32 %s20, 1
        // Predicated region
        $region13: #{tpu_custom_call.1} parent=11 // pred_check
          %p204 = pneg %p79
        $region14: #{tpu_custom_call.1} parent=11 // pred_check_branch
          %206 = sbr.rel (%p204) target = $region16
        $region15: #{tpu_custom_call.1} parent=11 // pred_region
          %s208 = ssub.s32 128, 128
          %209 = vsyncadd [#allocation7], %s208
          %s211 = sshll.u32 [#allocation6], 4
          %s212 = int_to_ptr.vmem [resolvable:$true] %s211
          %214 = dma.hbm_to_vmem [thread:$0]  %s1, 128, %s212, [#allocation7]
        $region16: #{tpu_custom_call.1} parent=11 // pred_fallthru
          _
        // Predicated region
        $region17: #{tpu_custom_call.1} parent=11 // pred_check
          %p215 = pneg %p100
        $region18: #{tpu_custom_call.1} parent=11 // pred_check_branch
          %217 = sbr.rel (%p215) target = $region20
        $region19: #{tpu_custom_call.1} parent=11 // pred_region
          %s219 = ssub.s32 768, 768
          %220 = vsyncadd [#allocation7], %s219
          %s221 = sshll.u32 [#allocation8], 4
          %s222 = int_to_ptr.vmem [resolvable:$true] %s221
          %227 = dma.hbm_to_vmem [thread:$0]  %s2, 768, %s222, [#allocation7], 64, 64, 4
        $region20: #{tpu_custom_call.1} parent=11 // pred_fallthru
          _
        // Predicated region
        $region21: #{tpu_custom_call.1} parent=11 // pred_check
          %p228 = pneg %p121
        $region22: #{tpu_custom_call.1} parent=11 // pred_check_branch
          %230 = sbr.rel (%p228) target = $region24
        $region23: #{tpu_custom_call.1} parent=11 // pred_region
          _
        $region24: #{tpu_custom_call.1} parent=11 // pred_fallthru
          _
        // Predicated region
        $region25: #{tpu_custom_call.1} parent=11 // pred_check
          %p231 = pneg %p142
        $region26: #{tpu_custom_call.1} parent=11 // pred_check_branch
          %233 = sbr.rel (%p231) target = $region28
        $region27: #{tpu_custom_call.1} parent=11 // pred_region
          %s235 = ssub.s32 256, 256
          %236 = vsyncadd [#allocation10], %s235
          %s237 = sshll.u32 [#allocation9], 4
          %s238 = int_to_ptr.vmem [resolvable:$true] %s237
          %243 = dma.hbm_to_vmem [thread:$0]  %s4, 256, %s238, [#allocation10], 64, 64, 4
        $region28: #{tpu_custom_call.1} parent=11 // pred_fallthru
          _
        // Predicated region
        $region29: #{tpu_custom_call.1} parent=11 // pred_check
          %p244 = pneg %p163
        $region30: #{tpu_custom_call.1} parent=11 // pred_check_branch
          %246 = sbr.rel (%p244) target = $region32
        $region31: #{tpu_custom_call.1} parent=11 // pred_region
          _
        $region32: #{tpu_custom_call.1} parent=11 // pred_fallthru
          _
      $region12: #{tpu_custom_call.1} parent=5 // pred_fallthru
        _
      %p247 = scmp.lt.s32.totalorder %s20, 2
      // Predicated region
      $region33: #{tpu_custom_call.1} parent=5 // pred_check
        %p248 = pneg %p247
      $region34: #{tpu_custom_call.1} parent=5 // pred_check_branch
        %250 = sbr.rel (%p248) target = $region36
      $region35: #{tpu_custom_call.1} parent=5 // pred_region
        // Predicated region
        $region37: #{tpu_custom_call.1} parent=35 // pred_check
          %p251 = pneg %p52
        $region38: #{tpu_custom_call.1} parent=35 // pred_check_branch
          %253 = sbr.rel (%p251) target = $region40
        $region39: #{tpu_custom_call.1} parent=35 // pred_region
          %s254 = sand.u32 %s42, 1
          %s255 = scalar_lea.sflag [#allocation4], %s254
          %s256 = sand.u32 %s42, 1
          %s257 = smul.addr %s256, 4
          %s258 = scalar_lea.vmem [#allocation3], %s257
          %s260 = ssub.s32 64, 64
          %261 = vsyncadd %s255, %s260
          %s262 = smul.addr %s27, 64
          %s263 = scalar_lea.hbm %s0, %s262
          %s265 = sshll.u32 %s258, 4
          %s266 = int_to_ptr.vmem [resolvable:$true] %s265
          %268 = dma.hbm_to_vmem [thread:$0]  %s263, 64, %s266, %s255
        $region40: #{tpu_custom_call.1} parent=35 // pred_fallthru
          _
      $region36: #{tpu_custom_call.1} parent=5 // pred_fallthru
        _
      %p269 = scmp.le.s32.totalorder 1, %s20
      %p270 = scmp.lt.s32.totalorder %s20, 3
      %p271 = pnand %p269, %p270
      %p272 = pneg %p271
      // Predicated region
      $region41: #{tpu_custom_call.1} parent=5 // pred_check
        _
      $region42: #{tpu_custom_call.1} parent=5 // pred_check_branch
        %274 = sbr.rel (%p271) target = $region44
      $region43: #{tpu_custom_call.1} parent=5 // pred_region
        %s275 = ssub.s32 %s20, 1
        %s276 = sand.u32 %s45, 1
        %s277 = scalar_lea.sflag [#allocation4], %s276
        %s278 = sand.u32 %s45, 1
        %s279 = smul.addr %s278, 4
        %s280 = scalar_lea.vmem [#allocation3], %s279
        // Predicated region
        $region45: #{tpu_custom_call.1} parent=43 // pred_check
          %p281 = pneg %p58
        $region46: #{tpu_custom_call.1} parent=43 // pred_check_branch
          %283 = sbr.rel (%p281) target = $region48
        $region47: #{tpu_custom_call.1} parent=43 // pred_region
          %284 = dma.done %s277, 64
        $region48: #{tpu_custom_call.1} parent=43 // pred_fallthru
          _
        // Predicated region
        $region49: #{tpu_custom_call.1} parent=43 // pred_check
          %p285 = pneg %p79
        $region50: #{tpu_custom_call.1} parent=43 // pred_check_branch
          %287 = sbr.rel (%p285) target = $region52
        $region51: #{tpu_custom_call.1} parent=43 // pred_region
          %288 = dma.done [#allocation7], 128
        $region52: #{tpu_custom_call.1} parent=43 // pred_fallthru
          _
        // Predicated region
        $region53: #{tpu_custom_call.1} parent=43 // pred_check
          %p289 = pneg %p100
        $region54: #{tpu_custom_call.1} parent=43 // pred_check_branch
          %291 = sbr.rel (%p289) target = $region56
        $region55: #{tpu_custom_call.1} parent=43 // pred_region
          %292 = dma.done [#allocation7], 768
        $region56: #{tpu_custom_call.1} parent=43 // pred_fallthru
          _
        // Predicated region
        $region57: #{tpu_custom_call.1} parent=43 // pred_check
          %p293 = pneg %p142
        $region58: #{tpu_custom_call.1} parent=43 // pred_check_branch
          %295 = sbr.rel (%p293) target = $region60
        $region59: #{tpu_custom_call.1} parent=43 // pred_region
          %296 = dma.done [#allocation10], 256
        $region60: #{tpu_custom_call.1} parent=43 // pred_fallthru
          _
        %s297 = sand.u32 %s45, 1
        %s298 = scalar_lea.sflag [#allocation4], %s297
        %s299 = sand.u32 %s45, 1
        %s300 = smul.addr %s299, 4
        %s301 = scalar_lea.vmem [#allocation3], %s300
        %p302 = pneg %p58
        %p303 = pneg %p55
        %p304 = pneg %p79
        %p305 = pneg %p76
        %p306 = pneg %p100
        %p307 = pneg %p97
        %p308 = pneg %p121
        %p309 = pneg %p118
        %p310 = pneg %p142
        %p311 = pneg %p139
        %p312 = pneg %p163
        %p313 = pneg %p160
        %p314 = pneg %p189
        %p315 = pneg %p186
        %s316 = sand.u32 %s176, 1
        %s317 = scalar_lea.sflag [#allocation5], %s316
        %s318 = sand.u32 %s176, 1
        %s319 = smul.addr %s318, 8
        %s320 = scalar_lea.vmem [#allocation11], %s319
        %p322 = scmp.eq.s32.totalorder %s30, 0
        // Predicated region
        $region61: #{tpu_custom_call.1} parent=43 // pred_check
          %p323 = pneg %p322
        $region62: #{tpu_custom_call.1} parent=43 // pred_check_branch
          %325 = sbr.rel (%p323) target = $region64
        $region63: #{tpu_custom_call.1} parent=43 // pred_region
          %vm326 = vcmask 261120
          %327 = vst.msk [vmem:[#allocation2] sm:$0xff] %vm326, 0.0
        $region64: #{tpu_custom_call.1} parent=43 // pred_fallthru
          _
        %v328 = vld [vmem:[%s280] sm:$0xf]
        %s329 = smul.u32 %s30, 4
        %s330 = smul.addr %s329, 4
        %s331 = scalar_lea.vmem [#allocation8], %s330
        %v332 = vld [vmem:[%s331] sm:$0xf]
        %v333 = vld [vmem:[%s331 + $0x4] sm:$0xf]
        %v334 = vld [vmem:[%s331 + $0x8] sm:$0xf]
        %v335 = vld [vmem:[%s331 + $0xc] sm:$0xf]
        %s336 = sadd.s32 %s329, 4
        %s337 = smul.addr %s336, 4
        %s338 = scalar_lea.vmem [#allocation8], %s337
        %v339 = vld [vmem:[%s338] sm:$0xf]
        %v340 = vld [vmem:[%s338 + $0x4] sm:$0xf]
        %v341 = vld [vmem:[%s338 + $0x8] sm:$0xf]
        %v342 = vld [vmem:[%s338 + $0xc] sm:$0xf]
        %s343 = sadd.s32 %s329, 8
        %s344 = smul.addr %s343, 4
        %s345 = scalar_lea.vmem [#allocation8], %s344
        %v346 = vld [vmem:[%s345] sm:$0xf]
        %v347 = vld [vmem:[%s345 + $0x4] sm:$0xf]
        %v348 = vld [vmem:[%s345 + $0x8] sm:$0xf]
        %v349 = vld [vmem:[%s345 + $0xc] sm:$0xf]
        %s350 = scalar_lea.vmem %s3, %s30
        %v351 = vld [vmem:[%s350] sm:$0x1]
        %s352 = sadd.s32 %s30, 1
        %s353 = scalar_lea.vmem %s3, %s352
        %v354 = vld [vmem:[%s353] sm:$0x1]
        %s355 = sadd.s32 %s30, 2
        %s356 = scalar_lea.vmem %s3, %s355
        %v357 = vld [vmem:[%s356] sm:$0x1]
        %v359 = vlaneseq
        %v360 = vshrl.u32 %v359, 7
        %v361 = vsub.s32 0, %v360
        %v362 = vrot.slane %v351, %v361
        %v368 = vunpack.c.l.b16 %v332
        %v369 = vunpack.c.l.b16 %v333
        %v370 = vunpack.c.l.b16 %v334
        %v371 = vunpack.c.l.b16 %v335
        %v372 = vpack.c.b16 %v369, %v368
        %v373 = vpack.c.b16 %v371, %v370
        %vm376 = vcmask 261120
        %v378 = vsel %vm376, %v328, 0
        %380 = vmatprep.subr.bf16.mxu0 0
        %381 = vmatpush1.bf16.msra.mxu0 %v372
        %382 = vmatprep.subr.bf16.mxu0 0
        %383 = vmatpush1.bf16.msra.mxu0 %v373
        %384 = vmatprep.subr.bf16.mxu0 0
        %385 = vmatpush1.bf16.msra.mxu0 0
        %386 = vmatprep.subr.bf16.mxu0 0
        %387 = vmatpush1.bf16.msra.mxu0 0
        %388 = vmatprep.subr.bf16.mxu0 0
        %389 = vmatpush1.bf16.msra.mxu0 0
        %390 = vmatprep.subr.bf16.mxu0 0
        %391 = vmatpush1.bf16.msra.mxu0 0
        %392 = vmatprep.subr.bf16.mxu0 0
        %393 = vmatpush1.bf16.msra.mxu0 0
        %394 = vmatprep.subr.bf16.mxu0 0
        %395 = vmatpush1.bf16.msra.mxu0 0
        %396 = vmatprep.subr.bf16.mxu0 0
        %397 = vmatpush1.bf16.msra.mxu0 0
        %398 = vmatprep.subr.bf16.mxu0 0
        %399 = vmatpush1.bf16.msra.mxu0 0
        %400 = vmatprep.subr.bf16.mxu0 0
        %401 = vmatpush1.bf16.msra.mxu0 0
        %402 = vmatprep.subr.bf16.mxu0 0
        %403 = vmatpush1.bf16.msra.mxu0 0
        %404 = vmatprep.subr.bf16.mxu0 0
        %405 = vmatpush1.bf16.msra.mxu0 0
        %406 = vmatprep.subr.bf16.mxu0 0
        %407 = vmatpush1.bf16.msra.mxu0 0
        %408 = vmatprep.subr.bf16.mxu0 0
        %409 = vmatpush1.bf16.msra.mxu0 0
        %410 = vmatprep.subr.bf16.mxu0 0
        %411 = vmatpush1.bf16.msra.mxu0 0
        %412 = vmatprep.mubr.bf16.mxu0 0
        %413 = vmatmul.mubr.bf16.gmra.mrb[0].mxu0 %v378
        %v414 = vpop.f32.mrb[0].mxu0
        %v415 = vadd.f32 %v362, %v414
        %v416 = vpop.f32.mrb[0].mxu0
        %v417 = vpop.f32.mrb[0].mxu0
        %v418 = vpop.f32.mrb[0].mxu0
        %419 = vdwg.mxu0
        %v421 = vlaneseq
        %v422 = vshrl.u32 %v421, 7
        %v423 = vsub.s32 0, %v422
        %v424 = vrot.slane %v354, %v423
        %v430 = vunpack.c.l.b16 %v339
        %v431 = vunpack.c.l.b16 %v340
        %v432 = vunpack.c.l.b16 %v341
        %v433 = vunpack.c.l.b16 %v342
        %v434 = vpack.c.b16 %v431, %v430
        %v435 = vpack.c.b16 %v433, %v432
        %438 = vmatprep.subr.bf16.mxu0 0
        %439 = vmatpush1.bf16.msra.mxu0 %v434
        %440 = vmatprep.subr.bf16.mxu0 0
        %441 = vmatpush1.bf16.msra.mxu0 %v435
        %442 = vmatprep.subr.bf16.mxu0 0
        %443 = vmatpush1.bf16.msra.mxu0 0
        %444 = vmatprep.subr.bf16.mxu0 0
        %445 = vmatpush1.bf16.msra.mxu0 0
        %446 = vmatprep.subr.bf16.mxu0 0
        %447 = vmatpush1.bf16.msra.mxu0 0
        %448 = vmatprep.subr.bf16.mxu0 0
        %449 = vmatpush1.bf16.msra.mxu0 0
        %450 = vmatprep.subr.bf16.mxu0 0
        %451 = vmatpush1.bf16.msra.mxu0 0
        %452 = vmatprep.subr.bf16.mxu0 0
        %453 = vmatpush1.bf16.msra.mxu0 0
        %454 = vmatprep.subr.bf16.mxu0 0
        %455 = vmatpush1.bf16.msra.mxu0 0
        %456 = vmatprep.subr.bf16.mxu0 0
        %457 = vmatpush1.bf16.msra.mxu0 0
        %458 = vmatprep.subr.bf16.mxu0 0
        %459 = vmatpush1.bf16.msra.mxu0 0
        %460 = vmatprep.subr.bf16.mxu0 0
        %461 = vmatpush1.bf16.msra.mxu0 0
        %462 = vmatprep.subr.bf16.mxu0 0
        %463 = vmatpush1.bf16.msra.mxu0 0
        %464 = vmatprep.subr.bf16.mxu0 0
        %465 = vmatpush1.bf16.msra.mxu0 0
        %466 = vmatprep.subr.bf16.mxu0 0
        %467 = vmatpush1.bf16.msra.mxu0 0
        %468 = vmatprep.subr.bf16.mxu0 0
        %469 = vmatpush1.bf16.msra.mxu0 0
        %470 = vmatprep.mubr.bf16.mxu0 0
        %471 = vmatmul.mubr.bf16.gmra.mrb[0].mxu0 %v378
        %v472 = vpop.f32.mrb[0].mxu0
        %v473 = vadd.f32 %v424, %v472
        %v474 = vpop.f32.mrb[0].mxu0
        %v475 = vpop.f32.mrb[0].mxu0
        %v476 = vpop.f32.mrb[0].mxu0
        %477 = vdwg.mxu0
        %v479 = vlaneseq
        %v480 = vshrl.u32 %v479, 7
        %v481 = vsub.s32 0, %v480
        %v482 = vrot.slane %v357, %v481
        %v488 = vunpack.c.l.b16 %v346
        %v489 = vunpack.c.l.b16 %v347
        %v490 = vunpack.c.l.b16 %v348
        %v491 = vunpack.c.l.b16 %v349
        %v492 = vpack.c.b16 %v489, %v488
        %v493 = vpack.c.b16 %v491, %v490
        %496 = vmatprep.subr.bf16.mxu0 0
        %497 = vmatpush1.bf16.msra.mxu0 %v492
        %498 = vmatprep.subr.bf16.mxu0 0
        %499 = vmatpush1.bf16.msra.mxu0 %v493
        %500 = vmatprep.subr.bf16.mxu0 0
        %501 = vmatpush1.bf16.msra.mxu0 0
        %502 = vmatprep.subr.bf16.mxu0 0
        %503 = vmatpush1.bf16.msra.mxu0 0
        %504 = vmatprep.subr.bf16.mxu0 0
        %505 = vmatpush1.bf16.msra.mxu0 0
        %506 = vmatprep.subr.bf16.mxu0 0
        %507 = vmatpush1.bf16.msra.mxu0 0
        %508 = vmatprep.subr.bf16.mxu0 0
        %509 = vmatpush1.bf16.msra.mxu0 0
        %510 = vmatprep.subr.bf16.mxu0 0
        %511 = vmatpush1.bf16.msra.mxu0 0
        %512 = vmatprep.subr.bf16.mxu0 0
        %513 = vmatpush1.bf16.msra.mxu0 0
        %514 = vmatprep.subr.bf16.mxu0 0
        %515 = vmatpush1.bf16.msra.mxu0 0
        %516 = vmatprep.subr.bf16.mxu0 0
        %517 = vmatpush1.bf16.msra.mxu0 0
        %518 = vmatprep.subr.bf16.mxu0 0
        %519 = vmatpush1.bf16.msra.mxu0 0
        %520 = vmatprep.subr.bf16.mxu0 0
        %521 = vmatpush1.bf16.msra.mxu0 0
        %522 = vmatprep.subr.bf16.mxu0 0
        %523 = vmatpush1.bf16.msra.mxu0 0
        %524 = vmatprep.subr.bf16.mxu0 0
        %525 = vmatpush1.bf16.msra.mxu0 0
        %526 = vmatprep.subr.bf16.mxu0 0
        %527 = vmatpush1.bf16.msra.mxu0 0
        %528 = vmatprep.mubr.bf16.mxu0 0
        %529 = vmatmul.mubr.bf16.gmra.mrb[0].mxu0 %v378
        %v530 = vpop.f32.mrb[0].mxu0
        %v531 = vadd.f32 %v482, %v530
        %v532 = vpop.f32.mrb[0].mxu0
        %v533 = vpop.f32.mrb[0].mxu0
        %v534 = vpop.f32.mrb[0].mxu0
        %535 = vdwg.mxu0
        %v536 = vld [vmem:[#allocation6] sm:$0xff]
        %v537 = vpack.c.bf16 %v415, %v415
        %v538 = vpack.c.bf16 %v473, %v473
        %v539 = vpack.c.bf16 %v531, %v531
        %vm540 = vcmask 64512
        %v542 = vsel %vm540, %v537, 0
        %v545 = vsel %vm540, %v538, 0
        %547 = vmatprep.subr.bf16.mxu0 0
        %548 = vmatpush1.bf16.xpose.msra.mxu0 %v545
        %549 = vmatprep.subr.bf16.mxu0 0
        %550 = vmatpush1.bf16.xpose.msra.mxu0 0
        %551 = vmatprep.subr.bf16.mxu0 0
        %552 = vmatpush1.bf16.xpose.msra.mxu0 0
        %553 = vmatprep.subr.bf16.mxu0 0
        %554 = vmatpush1.bf16.xpose.msra.mxu0 0
        %555 = vmatprep.subr.bf16.mxu0 0
        %556 = vmatpush1.bf16.xpose.msra.mxu0 0
        %557 = vmatprep.subr.bf16.mxu0 0
        %558 = vmatpush1.bf16.xpose.msra.mxu0 0
        %559 = vmatprep.subr.bf16.mxu0 0
        %560 = vmatpush1.bf16.xpose.msra.mxu0 0
        %561 = vmatprep.subr.bf16.mxu0 0
        %562 = vmatpush1.bf16.xpose.msra.mxu0 0
        %563 = vmatprep.subr.bf16.mxu0 0
        %564 = vmatpush1.bf16.xpose.msra.mxu0 0
        %565 = vmatprep.subr.bf16.mxu0 0
        %566 = vmatpush1.bf16.xpose.msra.mxu0 0
        %567 = vmatprep.subr.bf16.mxu0 0
        %568 = vmatpush1.bf16.xpose.msra.mxu0 0
        %569 = vmatprep.subr.bf16.mxu0 0
        %570 = vmatpush1.bf16.xpose.msra.mxu0 0
        %571 = vmatprep.subr.bf16.mxu0 0
        %572 = vmatpush1.bf16.xpose.msra.mxu0 0
        %573 = vmatprep.subr.bf16.mxu0 0
        %574 = vmatpush1.bf16.xpose.msra.mxu0 0
        %575 = vmatprep.subr.bf16.mxu0 0
        %576 = vmatpush1.bf16.xpose.msra.mxu0 0
        %577 = vmatprep.subr.bf16.mxu0 0
        %578 = vmatpush1.bf16.xpose.msra.mxu0 0
        %579 = vmatprep.mubr.bf16.mxu0 0
        %580 = vmatmul.mubr.bf16.gmra.mrb[0].mxu0 %v542
        %v581 = vpop.f32.mrb[0].mxu0
        %v582 = vadd.f32 %v536, %v581
        %v583 = vpop.f32.mrb[0].mxu0
        %v584 = vpop.f32.mrb[0].mxu0
        %v585 = vpop.f32.mrb[0].mxu0
        %586 = vdwg.mxu0
        %v587 = vsel %vm540, %v582, -inf
        %588 = vmax.xlane.f32.xlu0 %v587
        %v589 = vpop.xlane.xlu0 %588
        %v590 = vsub.f32 %v582, %v589
        %v591 = vmul.f32 %v590, 1.442695
        %v592 = vpow.pop %v591
        %v593 = vsel %vm540, %v592, 0.0
        %594 = vadd.xlane.f32.xlu0 %v593
        %v595 = vpop.xlane.xlu0 %594
        %v596 = vrcp.pop %v595
        %v597 = vmul.f32 %v592, %v596
        %v598 = vpack.c.bf16 %v597, %v597
        %v600 = vsel %vm540, %v598, 0
        %vm602 = vcmask 1043456
        %v604 = vsel %vm602, %v539, 0
        %606 = vmatprep.subr.bf16.mxu0 0
        %607 = vmatpush1.bf16.msra.mxu0 %v604
        %608 = vmatprep.subr.bf16.mxu0 0
        %609 = vmatpush1.bf16.msra.mxu0 0
        %610 = vmatprep.subr.bf16.mxu0 0
        %611 = vmatpush1.bf16.msra.mxu0 0
        %612 = vmatprep.subr.bf16.mxu0 0
        %613 = vmatpush1.bf16.msra.mxu0 0
        %614 = vmatprep.subr.bf16.mxu0 0
        %615 = vmatpush1.bf16.msra.mxu0 0
        %616 = vmatprep.subr.bf16.mxu0 0
        %617 = vmatpush1.bf16.msra.mxu0 0
        %618 = vmatprep.subr.bf16.mxu0 0
        %619 = vmatpush1.bf16.msra.mxu0 0
        %620 = vmatprep.subr.bf16.mxu0 0
        %621 = vmatpush1.bf16.msra.mxu0 0
        %622 = vmatprep.subr.bf16.mxu0 0
        %623 = vmatpush1.bf16.msra.mxu0 0
        %624 = vmatprep.subr.bf16.mxu0 0
        %625 = vmatpush1.bf16.msra.mxu0 0
        %626 = vmatprep.subr.bf16.mxu0 0
        %627 = vmatpush1.bf16.msra.mxu0 0
        %628 = vmatprep.subr.bf16.mxu0 0
        %629 = vmatpush1.bf16.msra.mxu0 0
        %630 = vmatprep.subr.bf16.mxu0 0
        %631 = vmatpush1.bf16.msra.mxu0 0
        %632 = vmatprep.subr.bf16.mxu0 0
        %633 = vmatpush1.bf16.msra.mxu0 0
        %634 = vmatprep.subr.bf16.mxu0 0
        %635 = vmatpush1.bf16.msra.mxu0 0
        %636 = vmatprep.subr.bf16.mxu0 0
        %637 = vmatpush1.bf16.msra.mxu0 0
        %638 = vmatprep.mubr.bf16.mxu0 0
        %639 = vmatmul.mubr.bf16.gmra.mrb[0].mxu0 %v600
        %v640 = vpop.f32.mrb[0].mxu0
        %v641 = vadd.f32 0.0, %v640
        %v642 = vpop.f32.mrb[0].mxu0
        %v643 = vpop.f32.mrb[0].mxu0
        %v644 = vpop.f32.mrb[0].mxu0
        %645 = vdwg.mxu0
        %647 = vrot.lane.b32.xlu0 %v537, 120
        %v648 = vpop.permute.xlu0 %647
        %650 = vrot.lane.b32.xlu0 %v538, 120
        %v651 = vpop.permute.xlu0 %650
        %v653 = vsel %vm540, %v648, 0
        %v656 = vsel %vm540, %v651, 0
        %658 = vmatprep.subr.bf16.mxu0 0
        %659 = vmatpush1.bf16.xpose.msra.mxu0 %v656
        %660 = vmatprep.subr.bf16.mxu0 0
        %661 = vmatpush1.bf16.xpose.msra.mxu0 0
        %662 = vmatprep.subr.bf16.mxu0 0
        %663 = vmatpush1.bf16.xpose.msra.mxu0 0
        %664 = vmatprep.subr.bf16.mxu0 0
        %665 = vmatpush1.bf16.xpose.msra.mxu0 0
        %666 = vmatprep.subr.bf16.mxu0 0
        %667 = vmatpush1.bf16.xpose.msra.mxu0 0
        %668 = vmatprep.subr.bf16.mxu0 0
        %669 = vmatpush1.bf16.xpose.msra.mxu0 0
        %670 = vmatprep.subr.bf16.mxu0 0
        %671 = vmatpush1.bf16.xpose.msra.mxu0 0
        %672 = vmatprep.subr.bf16.mxu0 0
        %673 = vmatpush1.bf16.xpose.msra.mxu0 0
        %674 = vmatprep.subr.bf16.mxu0 0
        %675 = vmatpush1.bf16.xpose.msra.mxu0 0
        %676 = vmatprep.subr.bf16.mxu0 0
        %677 = vmatpush1.bf16.xpose.msra.mxu0 0
        %678 = vmatprep.subr.bf16.mxu0 0
        %679 = vmatpush1.bf16.xpose.msra.mxu0 0
        %680 = vmatprep.subr.bf16.mxu0 0
        %681 = vmatpush1.bf16.xpose.msra.mxu0 0
        %682 = vmatprep.subr.bf16.mxu0 0
        %683 = vmatpush1.bf16.xpose.msra.mxu0 0
        %684 = vmatprep.subr.bf16.mxu0 0
        %685 = vmatpush1.bf16.xpose.msra.mxu0 0
        %686 = vmatprep.subr.bf16.mxu0 0
        %687 = vmatpush1.bf16.xpose.msra.mxu0 0
        %688 = vmatprep.subr.bf16.mxu0 0
        %689 = vmatpush1.bf16.xpose.msra.mxu0 0
        %690 = vmatprep.mubr.bf16.mxu0 0
        %691 = vmatmul.mubr.bf16.gmra.mrb[0].mxu0 %v653
        %v692 = vpop.f32.mrb[0].mxu0
        %v693 = vadd.f32 %v536, %v692
        %v694 = vpop.f32.mrb[0].mxu0
        %v695 = vpop.f32.mrb[0].mxu0
        %v696 = vpop.f32.mrb[0].mxu0
        %697 = vdwg.mxu0
        %v698 = vsel %vm540, %v693, -inf
        %699 = vmax.xlane.f32.xlu0 %v698
        %v700 = vpop.xlane.xlu0 %699
        %v701 = vsub.f32 %v693, %v700
        %v702 = vmul.f32 %v701, 1.442695
        %v703 = vpow.pop %v702
        %v704 = vsel %vm540, %v703, 0.0
        %705 = vadd.xlane.f32.xlu0 %v704
        %v706 = vpop.xlane.xlu0 %705
        %v707 = vrcp.pop %v706
        %v708 = vmul.f32 %v703, %v707
        %v709 = vpack.c.bf16 %v708, %v708
        %711 = vrot.lane.b32.xlu0 %v539, 120
        %v712 = vpop.permute.xlu0 %711
        %v714 = vsel %vm540, %v709, 0
        %v717 = vsel %vm602, %v712, 0
        %719 = vmatprep.subr.bf16.mxu0 0
        %720 = vmatpush1.bf16.msra.mxu0 %v717
        %721 = vmatprep.subr.bf16.mxu0 0
        %722 = vmatpush1.bf16.msra.mxu0 0
        %723 = vmatprep.subr.bf16.mxu0 0
        %724 = vmatpush1.bf16.msra.mxu0 0
        %725 = vmatprep.subr.bf16.mxu0 0
        %726 = vmatpush1.bf16.msra.mxu0 0
        %727 = vmatprep.subr.bf16.mxu0 0
        %728 = vmatpush1.bf16.msra.mxu0 0
        %729 = vmatprep.subr.bf16.mxu0 0
        %730 = vmatpush1.bf16.msra.mxu0 0
        %731 = vmatprep.subr.bf16.mxu0 0
        %732 = vmatpush1.bf16.msra.mxu0 0
        %733 = vmatprep.subr.bf16.mxu0 0
        %734 = vmatpush1.bf16.msra.mxu0 0
        %735 = vmatprep.subr.bf16.mxu0 0
        %736 = vmatpush1.bf16.msra.mxu0 0
        %737 = vmatprep.subr.bf16.mxu0 0
        %738 = vmatpush1.bf16.msra.mxu0 0
        %739 = vmatprep.subr.bf16.mxu0 0
        %740 = vmatpush1.bf16.msra.mxu0 0
        %741 = vmatprep.subr.bf16.mxu0 0
        %742 = vmatpush1.bf16.msra.mxu0 0
        %743 = vmatprep.subr.bf16.mxu0 0
        %744 = vmatpush1.bf16.msra.mxu0 0
        %745 = vmatprep.subr.bf16.mxu0 0
        %746 = vmatpush1.bf16.msra.mxu0 0
        %747 = vmatprep.subr.bf16.mxu0 0
        %748 = vmatpush1.bf16.msra.mxu0 0
        %749 = vmatprep.subr.bf16.mxu0 0
        %750 = vmatpush1.bf16.msra.mxu0 0
        %751 = vmatprep.mubr.bf16.mxu0 0
        %752 = vmatmul.mubr.bf16.gmra.mrb[0].mxu0 %v714
        %v753 = vpop.f32.mrb[0].mxu0
        %v754 = vadd.f32 0.0, %v753
        %v755 = vpop.f32.mrb[0].mxu0
        %v756 = vpop.f32.mrb[0].mxu0
        %v757 = vpop.f32.mrb[0].mxu0
        %758 = vdwg.mxu0
        %759 = vrot.lane.b32.xlu0 %v537, 112
        %v760 = vpop.permute.xlu0 %759
        %761 = vrot.lane.b32.xlu0 %v538, 112
        %v762 = vpop.permute.xlu0 %761
        %v764 = vsel %vm540, %v760, 0
        %v767 = vsel %vm540, %v762, 0
        %769 = vmatprep.subr.bf16.mxu0 0
        %770 = vmatpush1.bf16.xpose.msra.mxu0 %v767
        %771 = vmatprep.subr.bf16.mxu0 0
        %772 = vmatpush1.bf16.xpose.msra.mxu0 0
        %773 = vmatprep.subr.bf16.mxu0 0
        %774 = vmatpush1.bf16.xpose.msra.mxu0 0
        %775 = vmatprep.subr.bf16.mxu0 0
        %776 = vmatpush1.bf16.xpose.msra.mxu0 0
        %777 = vmatprep.subr.bf16.mxu0 0
        %778 = vmatpush1.bf16.xpose.msra.mxu0 0
        %779 = vmatprep.subr.bf16.mxu0 0
        %780 = vmatpush1.bf16.xpose.msra.mxu0 0
        %781 = vmatprep.subr.bf16.mxu0 0
        %782 = vmatpush1.bf16.xpose.msra.mxu0 0
        %783 = vmatprep.subr.bf16.mxu0 0
        %784 = vmatpush1.bf16.xpose.msra.mxu0 0
        %785 = vmatprep.subr.bf16.mxu0 0
        %786 = vmatpush1.bf16.xpose.msra.mxu0 0
        %787 = vmatprep.subr.bf16.mxu0 0
        %788 = vmatpush1.bf16.xpose.msra.mxu0 0
        %789 = vmatprep.subr.bf16.mxu0 0
        %790 = vmatpush1.bf16.xpose.msra.mxu0 0
        %791 = vmatprep.subr.bf16.mxu0 0
        %792 = vmatpush1.bf16.xpose.msra.mxu0 0
        %793 = vmatprep.subr.bf16.mxu0 0
        %794 = vmatpush1.bf16.xpose.msra.mxu0 0
        %795 = vmatprep.subr.bf16.mxu0 0
        %796 = vmatpush1.bf16.xpose.msra.mxu0 0
        %797 = vmatprep.subr.bf16.mxu0 0
        %798 = vmatpush1.bf16.xpose.msra.mxu0 0
        %799 = vmatprep.subr.bf16.mxu0 0
        %800 = vmatpush1.bf16.xpose.msra.mxu0 0
        %801 = vmatprep.mubr.bf16.mxu0 0
        %802 = vmatmul.mubr.bf16.gmra.mrb[0].mxu0 %v764
        %v803 = vpop.f32.mrb[0].mxu0
        %v804 = vadd.f32 %v536, %v803
        %v805 = vpop.f32.mrb[0].mxu0
        %v806 = vpop.f32.mrb[0].mxu0
        %v807 = vpop.f32.mrb[0].mxu0
        %808 = vdwg.mxu0
        %v809 = vsel %vm540, %v804, -inf
        %810 = vmax.xlane.f32.xlu0 %v809
        %v811 = vpop.xlane.xlu0 %810
        %v812 = vsub.f32 %v804, %v811
        %v813 = vmul.f32 %v812, 1.442695
        %v814 = vpow.pop %v813
        %v815 = vsel %vm540, %v814, 0.0
        %816 = vadd.xlane.f32.xlu0 %v815
        %v817 = vpop.xlane.xlu0 %816
        %v818 = vrcp.pop %v817
        %v819 = vmul.f32 %v814, %v818
        %v820 = vpack.c.bf16 %v819, %v819
        %821 = vrot.lane.b32.xlu0 %v539, 112
        %v822 = vpop.permute.xlu0 %821
        %v824 = vsel %vm540, %v820, 0
        %v827 = vsel %vm602, %v822, 0
        %829 = vmatprep.subr.bf16.mxu0 0
        %830 = vmatpush1.bf16.msra.mxu0 %v827
        %831 = vmatprep.subr.bf16.mxu0 0
        %832 = vmatpush1.bf16.msra.mxu0 0
        %833 = vmatprep.subr.bf16.mxu0 0
        %834 = vmatpush1.bf16.msra.mxu0 0
        %835 = vmatprep.subr.bf16.mxu0 0
        %836 = vmatpush1.bf16.msra.mxu0 0
        %837 = vmatprep.subr.bf16.mxu0 0
        %838 = vmatpush1.bf16.msra.mxu0 0
        %839 = vmatprep.subr.bf16.mxu0 0
        %840 = vmatpush1.bf16.msra.mxu0 0
        %841 = vmatprep.subr.bf16.mxu0 0
        %842 = vmatpush1.bf16.msra.mxu0 0
        %843 = vmatprep.subr.bf16.mxu0 0
        %844 = vmatpush1.bf16.msra.mxu0 0
        %845 = vmatprep.subr.bf16.mxu0 0
        %846 = vmatpush1.bf16.msra.mxu0 0
        %847 = vmatprep.subr.bf16.mxu0 0
        %848 = vmatpush1.bf16.msra.mxu0 0
        %849 = vmatprep.subr.bf16.mxu0 0
        %850 = vmatpush1.bf16.msra.mxu0 0
        %851 = vmatprep.subr.bf16.mxu0 0
        %852 = vmatpush1.bf16.msra.mxu0 0
        %853 = vmatprep.subr.bf16.mxu0 0
        %854 = vmatpush1.bf16.msra.mxu0 0
        %855 = vmatprep.subr.bf16.mxu0 0
        %856 = vmatpush1.bf16.msra.mxu0 0
        %857 = vmatprep.subr.bf16.mxu0 0
        %858 = vmatpush1.bf16.msra.mxu0 0
        %859 = vmatprep.subr.bf16.mxu0 0
        %860 = vmatpush1.bf16.msra.mxu0 0
        %861 = vmatprep.mubr.bf16.mxu0 0
        %862 = vmatmul.mubr.bf16.gmra.mrb[0].mxu0 %v824
        %v863 = vpop.f32.mrb[0].mxu0
        %v864 = vadd.f32 0.0, %v863
        %v865 = vpop.f32.mrb[0].mxu0
        %v866 = vpop.f32.mrb[0].mxu0
        %v867 = vpop.f32.mrb[0].mxu0
        %868 = vdwg.mxu0
        %869 = vrot.lane.b32.xlu0 %v537, 104
        %v870 = vpop.permute.xlu0 %869
        %871 = vrot.lane.b32.xlu0 %v538, 104
        %v872 = vpop.permute.xlu0 %871
        %v874 = vsel %vm540, %v870, 0
        %v877 = vsel %vm540, %v872, 0
        %879 = vmatprep.subr.bf16.mxu0 0
        %880 = vmatpush1.bf16.xpose.msra.mxu0 %v877
        %881 = vmatprep.subr.bf16.mxu0 0
        %882 = vmatpush1.bf16.xpose.msra.mxu0 0
        %883 = vmatprep.subr.bf16.mxu0 0
        %884 = vmatpush1.bf16.xpose.msra.mxu0 0
        %885 = vmatprep.subr.bf16.mxu0 0
        %886 = vmatpush1.bf16.xpose.msra.mxu0 0
        %887 = vmatprep.subr.bf16.mxu0 0
        %888 = vmatpush1.bf16.xpose.msra.mxu0 0
        %889 = vmatprep.subr.bf16.mxu0 0
        %890 = vmatpush1.bf16.xpose.msra.mxu0 0
        %891 = vmatprep.subr.bf16.mxu0 0
        %892 = vmatpush1.bf16.xpose.msra.mxu0 0
        %893 = vmatprep.subr.bf16.mxu0 0
        %894 = vmatpush1.bf16.xpose.msra.mxu0 0
        %895 = vmatprep.subr.bf16.mxu0 0
        %896 = vmatpush1.bf16.xpose.msra.mxu0 0
        %897 = vmatprep.subr.bf16.mxu0 0
        %898 = vmatpush1.bf16.xpose.msra.mxu0 0
        %899 = vmatprep.subr.bf16.mxu0 0
        %900 = vmatpush1.bf16.xpose.msra.mxu0 0
        %901 = vmatprep.subr.bf16.mxu0 0
        %902 = vmatpush1.bf16.xpose.msra.mxu0 0
        %903 = vmatprep.subr.bf16.mxu0 0
        %904 = vmatpush1.bf16.xpose.msra.mxu0 0
        %905 = vmatprep.subr.bf16.mxu0 0
        %906 = vmatpush1.bf16.xpose.msra.mxu0 0
        %907 = vmatprep.subr.bf16.mxu0 0
        %908 = vmatpush1.bf16.xpose.msra.mxu0 0
        %909 = vmatprep.subr.bf16.mxu0 0
        %910 = vmatpush1.bf16.xpose.msra.mxu0 0
        %911 = vmatprep.mubr.bf16.mxu0 0
        %912 = vmatmul.mubr.bf16.gmra.mrb[0].mxu0 %v874
        %v913 = vpop.f32.mrb[0].mxu0
        %v914 = vadd.f32 %v536, %v913
        %v915 = vpop.f32.mrb[0].mxu0
        %v916 = vpop.f32.mrb[0].mxu0
        %v917 = vpop.f32.mrb[0].mxu0
        %918 = vdwg.mxu0
        %v919 = vsel %vm540, %v914, -inf
        %920 = vmax.xlane.f32.xlu0 %v919
        %v921 = vpop.xlane.xlu0 %920
        %v922 = vsub.f32 %v914, %v921
        %v923 = vmul.f32 %v922, 1.442695
        %v924 = vpow.pop %v923
        %v925 = vsel %vm540, %v924, 0.0
        %926 = vadd.xlane.f32.xlu0 %v925
        %v927 = vpop.xlane.xlu0 %926
        %v928 = vrcp.pop %v927
        %v929 = vmul.f32 %v924, %v928
        %v930 = vpack.c.bf16 %v929, %v929
        %931 = vrot.lane.b32.xlu0 %v539, 104
        %v932 = vpop.permute.xlu0 %931
        %v934 = vsel %vm540, %v930, 0
        %v937 = vsel %vm602, %v932, 0
        %939 = vmatprep.subr.bf16.mxu0 0
        %940 = vmatpush1.bf16.msra.mxu0 %v937
        %941 = vmatprep.subr.bf16.mxu0 0
        %942 = vmatpush1.bf16.msra.mxu0 0
        %943 = vmatprep.subr.bf16.mxu0 0
        %944 = vmatpush1.bf16.msra.mxu0 0
        %945 = vmatprep.subr.bf16.mxu0 0
        %946 = vmatpush1.bf16.msra.mxu0 0
        %947 = vmatprep.subr.bf16.mxu0 0
        %948 = vmatpush1.bf16.msra.mxu0 0
        %949 = vmatprep.subr.bf16.mxu0 0
        %950 = vmatpush1.bf16.msra.mxu0 0
        %951 = vmatprep.subr.bf16.mxu0 0
        %952 = vmatpush1.bf16.msra.mxu0 0
        %953 = vmatprep.subr.bf16.mxu0 0
        %954 = vmatpush1.bf16.msra.mxu0 0
        %955 = vmatprep.subr.bf16.mxu0 0
        %956 = vmatpush1.bf16.msra.mxu0 0
        %957 = vmatprep.subr.bf16.mxu0 0
        %958 = vmatpush1.bf16.msra.mxu0 0
        %959 = vmatprep.subr.bf16.mxu0 0
        %960 = vmatpush1.bf16.msra.mxu0 0
        %961 = vmatprep.subr.bf16.mxu0 0
        %962 = vmatpush1.bf16.msra.mxu0 0
        %963 = vmatprep.subr.bf16.mxu0 0
        %964 = vmatpush1.bf16.msra.mxu0 0
        %965 = vmatprep.subr.bf16.mxu0 0
        %966 = vmatpush1.bf16.msra.mxu0 0
        %967 = vmatprep.subr.bf16.mxu0 0
        %968 = vmatpush1.bf16.msra.mxu0 0
        %969 = vmatprep.subr.bf16.mxu0 0
        %970 = vmatpush1.bf16.msra.mxu0 0
        %971 = vmatprep.mubr.bf16.mxu0 0
        %972 = vmatmul.mubr.bf16.gmra.mrb[0].mxu0 %v934
        %v973 = vpop.f32.mrb[0].mxu0
        %v974 = vadd.f32 0.0, %v973
        %v975 = vpop.f32.mrb[0].mxu0
        %v976 = vpop.f32.mrb[0].mxu0
        %v977 = vpop.f32.mrb[0].mxu0
        %978 = vdwg.mxu0
        %980 = vrot.lane.b32.xlu0 %v754, 8
        %v981 = vpop.permute.xlu0 %980
        %984 = vrot.lane.b32.xlu0 %v864, 16
        %v985 = vpop.permute.xlu0 %984
        %988 = vrot.lane.b32.xlu0 %v974, 24
        %v989 = vpop.permute.xlu0 %988
        %v991 = vsel %vm540, %v641, %v981
        %vm992 = vcmask 130048
        %v993 = vsel %vm992, %v991, %v985
        %vm994 = vcmask 195584
        %v995 = vsel %vm994, %v993, %v989
        %v996 = vld [vmem:[#allocation2] sm:$0xff]
        %v997 = vpack.c.bf16 %v995, %v995
        %s998 = smul.addr %s329, 4
        %s999 = scalar_lea.vmem [#allocation9], %s998
        %v1000 = vld [vmem:[%s999] sm:$0xf]
        %v1001 = vld [vmem:[%s999 + $0x4] sm:$0xf]
        %v1002 = vld [vmem:[%s999 + $0x8] sm:$0xf]
        %v1003 = vld [vmem:[%s999 + $0xc] sm:$0xf]
        %v1008 = vunpack.c.l.b16 %v1000
        %v1009 = vunpack.c.l.b16 %v1001
        %v1010 = vunpack.c.l.b16 %v1002
        %v1011 = vunpack.c.l.b16 %v1003
        %v1012 = vpack.c.b16 %v1009, %v1008
        %v1013 = vpack.c.b16 %v1011, %v1010
        %v1017 = vsel %vm376, %v997, 0
        %1019 = vmatprep.subr.bf16.mxu0 0
        %1020 = vmatpush1.bf16.msra.mxu0 %v1012
        %1021 = vmatprep.subr.bf16.mxu0 0
        %1022 = vmatpush1.bf16.msra.mxu0 %v1013
        %1023 = vmatprep.subr.bf16.mxu0 0
        %1024 = vmatpush1.bf16.msra.mxu0 0
        %1025 = vmatprep.subr.bf16.mxu0 0
        %1026 = vmatpush1.bf16.msra.mxu0 0
        %1027 = vmatprep.subr.bf16.mxu0 0
        %1028 = vmatpush1.bf16.msra.mxu0 0
        %1029 = vmatprep.subr.bf16.mxu0 0
        %1030 = vmatpush1.bf16.msra.mxu0 0
        %1031 = vmatprep.subr.bf16.mxu0 0
        %1032 = vmatpush1.bf16.msra.mxu0 0
        %1033 = vmatprep.subr.bf16.mxu0 0
        %1034 = vmatpush1.bf16.msra.mxu0 0
        %1035 = vmatprep.subr.bf16.mxu0 0
        %1036 = vmatpush1.bf16.msra.mxu0 0
        %1037 = vmatprep.subr.bf16.mxu0 0
        %1038 = vmatpush1.bf16.msra.mxu0 0
        %1039 = vmatprep.subr.bf16.mxu0 0
        %1040 = vmatpush1.bf16.msra.mxu0 0
        %1041 = vmatprep.subr.bf16.mxu0 0
        %1042 = vmatpush1.bf16.msra.mxu0 0
        %1043 = vmatprep.subr.bf16.mxu0 0
        %1044 = vmatpush1.bf16.msra.mxu0 0
        %1045 = vmatprep.subr.bf16.mxu0 0
        %1046 = vmatpush1.bf16.msra.mxu0 0
        %1047 = vmatprep.subr.bf16.mxu0 0
        %1048 = vmatpush1.bf16.msra.mxu0 0
        %1049 = vmatprep.subr.bf16.mxu0 0
        %1050 = vmatpush1.bf16.msra.mxu0 0
        %1051 = vmatprep.mubr.bf16.mxu0 0
        %1052 = vmatmul.mubr.bf16.gmra.mrb[0].mxu0 %v1017
        %v1053 = vpop.f32.mrb[0].mxu0
        %v1054 = vadd.f32 0.0, %v1053
        %v1055 = vpop.f32.mrb[0].mxu0
        %v1056 = vpop.f32.mrb[0].mxu0
        %v1057 = vpop.f32.mrb[0].mxu0
        %1058 = vdwg.mxu0
        %v1059 = vadd.f32 %v996, %v1054
        %1060 = vst.msk [vmem:[#allocation2] sm:$0xff] %vm376, %v1059
        // Predicated region
        $region65: #{tpu_custom_call.1} parent=43 // pred_check
          %p1061 = pneg %p322
        $region66: #{tpu_custom_call.1} parent=43 // pred_check_branch
          %1063 = sbr.rel (%p1061) target = $region68
        $region67: #{tpu_custom_call.1} parent=43 // pred_region
          %v1064 = vld [vmem:[#allocation2] sm:$0xff]
          %v1065 = vld [vmem:[%s5] sm:$0x1]
          %v1067 = vlaneseq
          %v1068 = vshrl.u32 %v1067, 7
          %v1069 = vsub.s32 0, %v1068
          %v1070 = vrot.slane %v1065, %v1069
          %v1072 = vadd.f32 %v1064, %v1070
          %1073 = vst.msk [vmem:[%s320] sm:$0xff] %vm376, %v1072
        $region68: #{tpu_custom_call.1} parent=43 // pred_fallthru
          _
        %s1074 = sand.u32 %s176, 1
        %s1075 = scalar_lea.sflag [#allocation5], %s1074
        %s1076 = sand.u32 %s176, 1
        %s1077 = smul.addr %s1076, 8
        %s1078 = scalar_lea.vmem [#allocation11], %s1077
        // Predicated region
        $region69: #{tpu_custom_call.1} parent=43 // pred_check
          %p1079 = pneg %p186
        $region70: #{tpu_custom_call.1} parent=43 // pred_check_branch
          %1081 = sbr.rel (%p1079) target = $region72
        $region71: #{tpu_custom_call.1} parent=43 // pred_region
          %s1083 = ssub.s32 128, 128
          %1084 = vsyncadd %s1075, %s1083
          %s1085 = smul.addr %s29, 128
          %s1086 = scalar_lea.hbm %s6, %s1085
          %s1088 = sshll.u32 %s1078, 4
          %s1089 = int_to_ptr.vmem [resolvable:$true] %s1088
          %1091 = dma.vmem_to_hbm [thread:$0]  %s1089, 128, %s1086, %s1075
        $region72: #{tpu_custom_call.1} parent=43 // pred_fallthru
          _
      $region44: #{tpu_custom_call.1} parent=5 // pred_fallthru
        _
      %p1092 = scmp.le.s32.totalorder 2, %s20
      // Predicated region
      $region73: #{tpu_custom_call.1} parent=5 // pred_check
        %p1093 = pneg %p1092
      $region74: #{tpu_custom_call.1} parent=5 // pred_check_branch
        %1095 = sbr.rel (%p1093) target = $region76
      $region75: #{tpu_custom_call.1} parent=5 // pred_region
        %s1096 = ssub.s32 %s20, 2
        // Predicated region
        $region77: #{tpu_custom_call.1} parent=75 // pred_check
          %p1097 = pneg %p192
        $region78: #{tpu_custom_call.1} parent=75 // pred_check_branch
          %1099 = sbr.rel (%p1097) target = $region80
        $region79: #{tpu_custom_call.1} parent=75 // pred_region
          %s1100 = sand.u32 %s177, 1
          %s1101 = scalar_lea.sflag [#allocation5], %s1100
          %s1102 = sand.u32 %s177, 1
          %s1103 = smul.addr %s1102, 8
          %s1104 = scalar_lea.vmem [#allocation11], %s1103
          %1105 = dma.done %s1101, 128
        $region80: #{tpu_custom_call.1} parent=75 // pred_fallthru
          _
      $region76: #{tpu_custom_call.1} parent=5 // pred_fallthru
        _
    $region6: #{tpu_custom_call.1} parent=1 // loop_footer
      %s24 = sadd.s32 1, %s20
    $region7: #{tpu_custom_call.1} parent=1 // loop_footer_branch
      %19 = sbr.rel target = $region3
    $region8: #{tpu_custom_call.1} parent=1 // loop_exit
      _
    %1106 = vsyncpa [#allocation4], 1
    %s1107 = scalar_lea.sflag [#allocation4], 1
    %1108 = vsyncpa %s1107, 1
    %1109 = vsyncpa [#allocation7], 1
    %1110 = vsyncpa [#allocation10], 1
    %1111 = vsyncpa [#allocation5], 1
    %s1112 = scalar_lea.sflag [#allocation5], 1
    %1113 = vsyncpa %s1112, 1

</llo_original>
